<compile_context>
chip_gen: v6e
topology: v6e:2x2x1
jax: 0.10.0
libtpu: 0.0.40
codegen_flags: <defaults>
</compile_context>

<pallas_src>
import jax
import jax.numpy as jnp
from jax.experimental import pallas as pl
from jax.experimental.pallas import tpu as pltpu

LAYER_DIMS = [784, 128, 64, 32, 15, 32, 64, 128, 784]   # logical (PyTorch) dims
PADDED_DIMS = [784, 128, 64, 32, 16, 32, 64, 128, 784]  # latent 15 -> 16 (zero pad)
N_LAYERS = 8
MAX_DIM = 784
LATENT_LAYER = 3   # Linear(32, 15): no activation
FINAL_LAYER = 7    # Linear(128, 784): Sigmoid


def _round_up(v, m):
    return -(-v // m) * m


def _ae_kernel(x_ref,
               w1, w2, w3, w4, w5, w6, w7, w8,
               b_ref, o_ref):
    """Full encoder+decoder chain on one (TILE_B, 784) batch tile."""
    ws = (w1, w2, w3, w4, w5, w6, w7, w8)
    # f32 -> bf16 cast in-kernel (VPU, hidden under HBM slack); bf16 MXU
    # operands with f32 accumulation, bias add / activations in f32.
    h = x_ref[...].astype(jnp.bfloat16)                    # (TILE_B, 784)
    for li in range(N_LAYERS):
        out_dim = PADDED_DIMS[li + 1]
        y = jnp.dot(h, ws[li][...], preferred_element_type=jnp.float32)
        y = y + b_ref[li:li + 1, 0:out_dim]                # (1, out_dim) f32 bias
        if li == FINAL_LAYER:
            # sigmoid(y) = 1 / (1 + exp(-y)); exp + approx reciprocal -> EUP slot.
            o_ref[...] = pl.reciprocal(1.0 + jnp.exp(-y),
                                       approx=True).astype(o_ref.dtype)
        elif li == LATENT_LAYER:
            h = y.astype(jnp.bfloat16)                     # latent: no activation
        else:
            h = jnp.maximum(y, 0.0).astype(jnp.bfloat16)   # ReLU (f32) -> bf16


def init_params(key):
    """PyTorch nn.Linear default init: U(-1/sqrt(fan_in), 1/sqrt(fan_in))."""
    params = []
    for i in range(N_LAYERS):
        fan_in, fan_out = LAYER_DIMS[i], LAYER_DIMS[i + 1]
        key, kw, kb = jax.random.split(key, 3)
        bound = 1.0 / (fan_in ** 0.5)
        # Stored as (in, out) == W.T so the kernel does h @ W_t directly.
        w_t = jax.random.uniform(kw, (fan_in, fan_out), jnp.float32, -bound, bound)
        b = jax.random.uniform(kb, (fan_out,), jnp.float32, -bound, bound)
        params.append((w_t, b))
    return params


def pack_params(params):
    """Pad to PADDED_DIMS, cast weights to bf16, pack biases into one array."""
    weights, biases = [], []
    for li, (w_t, b) in enumerate(params):
        in_d, out_d = LAYER_DIMS[li], LAYER_DIMS[li + 1]
        pin, pout = PADDED_DIMS[li], PADDED_DIMS[li + 1]
        w_p = jnp.zeros((pin, pout), jnp.float32).at[:in_d, :out_d].set(w_t)
        b_p = jnp.zeros((MAX_DIM,), jnp.float32).at[:out_d].set(b)
        weights.append(w_p.astype(jnp.bfloat16))           # bf16 MXU operands
        biases.append(b_p)
    b_all = jnp.stack(biases, axis=0)                      # (8, 784) f32
    return weights, b_all


def _choose_tile(B, tile_b):
    """Pick batch tile: big (amortize per-step overhead), >= 2 grid steps when
    the batch allows it (v7x 2-TC sharding), and divides the padded batch when
    cheap (avoids the jnp.pad HBM pass / dead rows)."""
    B8 = _round_up(B, 8)
    tb = min(_round_up(max(tile_b, 8), 8), B8)
    # v7x megacore: guarantee at least 2 grid steps when the batch permits.
    half = _round_up(-(-B8 // 2), 8)
    if B8 >= 16 and tb > half:
        tb = half
    # Snap to the largest multiple of 8 <= tb that divides B8, if not much smaller.
    t = tb
    while t >= 8 and B8 % t != 0:
        t -= 8
    if t >= 8 and 2 * t >= tb:
        tb = t
    return tb, _round_up(B8, tb)


def linear_autoencoder_forward(x_nchw, weights, b_all, tile_b=1024):
    """x_nchw: (B, 1, 28, 28) f32 -> (B, 1, 28, 28) f32."""
    B = x_nchw.shape[0]
    tb, B_pad = _choose_tile(B, tile_b)

    x_flat = x_nchw.reshape(B, MAX_DIM)                    # nn.Flatten (free reshape, f32)
    if B_pad != B:
        # Only taken for ragged batches the tile chooser could not cover exactly.
        x_flat = jnp.pad(x_flat, ((0, B_pad - B), (0, 0)))

    grid = (B_pad // tb,)
    in_specs = (
        [pl.BlockSpec((tb, MAX_DIM), lambda i: (i, 0))]                 # x tile (f32)
        + [pl.BlockSpec(w.shape, lambda i: (0, 0)) for w in weights]    # resident bf16
        + [pl.BlockSpec(b_all.shape, lambda i: (0, 0))]                 # resident f32
    )

    flops = 2 * B_pad * sum(PADDED_DIMS[i] * PADDED_DIMS[i + 1]
                            for i in range(N_LAYERS))
    bytes_accessed = (B_pad * MAX_DIM * (4 + 4)            # f32 in, f32 out
                      + sum(int(w.size) * 2 for w in weights)
                      + int(b_all.size) * 4)
    cost = pl.CostEstimate(flops=flops,
                           transcendentals=2 * B_pad * MAX_DIM,  # exp + rcp
                           bytes_accessed=bytes_accessed)

    out_flat = pl.pallas_call(
        _ae_kernel,
        out_shape=jax.ShapeDtypeStruct((B_pad, MAX_DIM), jnp.float32),
        grid=grid,
        in_specs=in_specs,
        out_specs=pl.BlockSpec((tb, MAX_DIM), lambda i: (i, 0)),
        compiler_params=pltpu.CompilerParams(
            dimension_semantics=("parallel",),
            vmem_limit_bytes=32 * 1024 * 1024,
        ),
        cost_estimate=cost,
    )(x_flat, *weights, b_all)

    return out_flat[:B].reshape(B, 1, 28, 28)              # x.view(-1, 1, 28, 28)


def reference_forward(x_nchw, params):
    """Pure-JAX f32 reference matching the PyTorch module."""
    h = x_nchw.reshape(x_nchw.shape[0], MAX_DIM)
    for li, (w_t, b) in enumerate(params):
        h = h @ w_t + b
        if li == FINAL_LAYER:
            h = jax.nn.sigmoid(h)
        elif li != LATENT_LAYER:
            h = jnp.maximum(h, 0.0)
    return h.reshape(-1, 1, 28, 28)


if __name__ == "__main__":
    key = jax.random.PRNGKey(0)
    key, kx1, kx2 = jax.random.split(key, 3)

    params = init_params(key)
    weights, b_all = pack_params(params)

    # Case 1: tiny batch (single grid step).
    B1 = 8
    x1 = jax.random.uniform(kx1, (B1, 1, 28, 28), jnp.float32)    # MNIST-like
    y1 = jax.block_until_ready(linear_autoencoder_forward(x1, weights, b_all))
    assert y1.shape == (B1, 1, 28, 28), y1.shape
    assert y1.dtype == jnp.float32, y1.dtype
    assert bool(jnp.all((y1 > 0.0) & (y1 < 1.0)))                  # sigmoid range
    err1 = float(jnp.max(jnp.abs(y1 - reference_forward(x1, params))))
    assert err1 < 5e-2, f"max abs err vs f32 reference (B=8): {err1}"

    # Case 2: ragged batch exercising multi-step grid + tail padding path.
    B2 = 20
    x2 = jax.random.uniform(kx2, (B2, 1, 28, 28), jnp.float32)
    y2 = jax.block_until_ready(linear_autoencoder_forward(x2, weights, b_all))
    assert y2.shape == (B2, 1, 28, 28), y2.shape
    assert bool(jnp.all((y2 > 0.0) & (y2 < 1.0)))
    err2 = float(jnp.max(jnp.abs(y2 - reference_forward(x2, params))))
    assert err2 < 5e-2, f"max abs err vs f32 reference (B=20): {err2}"

    print("KERNEL_OK")
</pallas_src>

<mosaic_0001>
module attributes {stable_mosaic.version = 11 : i64} {
  func.func @_ae_kernel(%arg0: i32, %arg1: memref<8x784xf32, #tpu.memory_space<vmem>>, %arg2: memref<784x128xbf16, #tpu.memory_space<vmem>>, %arg3: memref<128x64xbf16, #tpu.memory_space<vmem>>, %arg4: memref<64x32xbf16, #tpu.memory_space<vmem>>, %arg5: memref<32x16xbf16, #tpu.memory_space<vmem>>, %arg6: memref<16x32xbf16, #tpu.memory_space<vmem>>, %arg7: memref<32x64xbf16, #tpu.memory_space<vmem>>, %arg8: memref<64x128xbf16, #tpu.memory_space<vmem>>, %arg9: memref<128x784xbf16, #tpu.memory_space<vmem>>, %arg10: memref<8x784xf32, #tpu.memory_space<vmem>>, %arg11: memref<8x784xf32, #tpu.memory_space<vmem>>) attributes {dimension_semantics = [#tpu.dimension_semantics<parallel>], iteration_bounds = array<i64: 1>, scalar_prefetch = 0 : i64, scratch_operands = 0 : i64, tpu.core_type = #tpu.core_type<tc>, window_params = [{transform_indices = @transform_0, window_bounds = array<i64: 8, 784>}, {pipeline_mode = #tpu.pipeline_mode<synchronous>, transform_indices = @transform_1, window_bounds = array<i64: 784, 128>}, {pipeline_mode = #tpu.pipeline_mode<synchronous>, transform_indices = @transform_2, window_bounds = array<i64: 128, 64>}, {pipeline_mode = #tpu.pipeline_mode<synchronous>, transform_indices = @transform_3, window_bounds = array<i64: 64, 32>}, {pipeline_mode = #tpu.pipeline_mode<synchronous>, transform_indices = @transform_4, window_bounds = array<i64: 32, 16>}, {pipeline_mode = #tpu.pipeline_mode<synchronous>, transform_indices = @transform_5, window_bounds = array<i64: 16, 32>}, {pipeline_mode = #tpu.pipeline_mode<synchronous>, transform_indices = @transform_6, window_bounds = array<i64: 32, 64>}, {pipeline_mode = #tpu.pipeline_mode<synchronous>, transform_indices = @transform_7, window_bounds = array<i64: 64, 128>}, {pipeline_mode = #tpu.pipeline_mode<synchronous>, transform_indices = @transform_8, window_bounds = array<i64: 128, 784>}, {pipeline_mode = #tpu.pipeline_mode<synchronous>, transform_indices = @transform_9, window_bounds = array<i64: 8, 784>}, {transform_indices = @transform_10, window_bounds = array<i64: 8, 784>}]} {
    %c0 = arith.constant 0 : index
    %c0_0 = arith.constant 0 : index
    %0 = vector.load %arg1[%c0, %c0_0] : memref<8x784xf32, #tpu.memory_space<vmem>>, vector<8x784xf32>
    %1 = arith.truncf %0 : vector<8x784xf32> to vector<8x784xbf16>
    %c0_1 = arith.constant 0 : index
    %c0_2 = arith.constant 0 : index
    %2 = vector.load %arg2[%c0_1, %c0_2] : memref<784x128xbf16, #tpu.memory_space<vmem>>, vector<784x128xbf16>
    %cst = arith.constant dense<0.000000e+00> : vector<8x128xf32>
    %3 = tpu.matmul %1, %2, %cst {dimension_numbers = #tpu.dot_dimension_numbers<[1], [0], [0], [1], [0, 0, 1, 1], [], []>} : vector<8x784xbf16>, vector<784x128xbf16>, vector<8x128xf32> -> vector<8x128xf32>
    %c0_3 = arith.constant 0 : index
    %c0_4 = arith.constant 0 : index
    %4 = vector.load %arg10[%c0_3, %c0_4] : memref<8x784xf32, #tpu.memory_space<vmem>>, vector<1x128xf32>
    %5 = vector.broadcast %4 : vector<1x128xf32> to vector<8x128xf32>
    %6 = arith.addf %3, %5 : vector<8x128xf32>
    %cst_5 = arith.constant 0.000000e+00 : f32
    %7 = vector.broadcast %cst_5 : f32 to vector<8x128xf32>
    %8 = arith.maximumf %6, %7 : vector<8x128xf32>
    %9 = arith.truncf %8 : vector<8x128xf32> to vector<8x128xbf16>
    %c0_6 = arith.constant 0 : index
    %c0_7 = arith.constant 0 : index
    %10 = vector.load %arg3[%c0_6, %c0_7] : memref<128x64xbf16, #tpu.memory_space<vmem>>, vector<128x64xbf16>
    %cst_8 = arith.constant dense<0.000000e+00> : vector<8x64xf32>
    %11 = tpu.matmul %9, %10, %cst_8 {dimension_numbers = #tpu.dot_dimension_numbers<[1], [0], [0], [1], [0, 0, 1, 1], [], []>} : vector<8x128xbf16>, vector<128x64xbf16>, vector<8x64xf32> -> vector<8x64xf32>
    %c1 = arith.constant 1 : index
    %c0_9 = arith.constant 0 : index
    %12 = vector.load %arg10[%c1, %c0_9] : memref<8x784xf32, #tpu.memory_space<vmem>>, vector<1x64xf32>
    %13 = vector.broadcast %12 : vector<1x64xf32> to vector<8x64xf32>
    %14 = arith.addf %11, %13 : vector<8x64xf32>
    %cst_10 = arith.constant 0.000000e+00 : f32
    %15 = vector.broadcast %cst_10 : f32 to vector<8x64xf32>
    %16 = arith.maximumf %14, %15 : vector<8x64xf32>
    %17 = arith.truncf %16 : vector<8x64xf32> to vector<8x64xbf16>
    %c0_11 = arith.constant 0 : index
    %c0_12 = arith.constant 0 : index
    %18 = vector.load %arg4[%c0_11, %c0_12] : memref<64x32xbf16, #tpu.memory_space<vmem>>, vector<64x32xbf16>
    %cst_13 = arith.constant dense<0.000000e+00> : vector<8x32xf32>
    %19 = tpu.matmul %17, %18, %cst_13 {dimension_numbers = #tpu.dot_dimension_numbers<[1], [0], [0], [1], [0, 0, 1, 1], [], []>} : vector<8x64xbf16>, vector<64x32xbf16>, vector<8x32xf32> -> vector<8x32xf32>
    %c2 = arith.constant 2 : index
    %c0_14 = arith.constant 0 : index
    %20 = vector.load %arg10[%c2, %c0_14] : memref<8x784xf32, #tpu.memory_space<vmem>>, vector<1x32xf32>
    %21 = vector.broadcast %20 : vector<1x32xf32> to vector<8x32xf32>
    %22 = arith.addf %19, %21 : vector<8x32xf32>
    %cst_15 = arith.constant 0.000000e+00 : f32
    %23 = vector.broadcast %cst_15 : f32 to vector<8x32xf32>
    %24 = arith.maximumf %22, %23 : vector<8x32xf32>
    %25 = arith.truncf %24 : vector<8x32xf32> to vector<8x32xbf16>
    %c0_16 = arith.constant 0 : index
    %c0_17 = arith.constant 0 : index
    %26 = vector.load %arg5[%c0_16, %c0_17] : memref<32x16xbf16, #tpu.memory_space<vmem>>, vector<32x16xbf16>
    %cst_18 = arith.constant dense<0.000000e+00> : vector<8x16xf32>
    %27 = tpu.matmul %25, %26, %cst_18 {dimension_numbers = #tpu.dot_dimension_numbers<[1], [0], [0], [1], [0, 0, 1, 1], [], []>} : vector<8x32xbf16>, vector<32x16xbf16>, vector<8x16xf32> -> vector<8x16xf32>
    %c3 = arith.constant 3 : index
    %c0_19 = arith.constant 0 : index
    %28 = vector.load %arg10[%c3, %c0_19] : memref<8x784xf32, #tpu.memory_space<vmem>>, vector<1x16xf32>
    %29 = vector.broadcast %28 : vector<1x16xf32> to vector<8x16xf32>
    %30 = arith.addf %27, %29 : vector<8x16xf32>
    %31 = arith.truncf %30 : vector<8x16xf32> to vector<8x16xbf16>
    %c0_20 = arith.constant 0 : index
    %c0_21 = arith.constant 0 : index
    %32 = vector.load %arg6[%c0_20, %c0_21] : memref<16x32xbf16, #tpu.memory_space<vmem>>, vector<16x32xbf16>
    %cst_22 = arith.constant dense<0.000000e+00> : vector<8x32xf32>
    %33 = tpu.matmul %31, %32, %cst_22 {dimension_numbers = #tpu.dot_dimension_numbers<[1], [0], [0], [1], [0, 0, 1, 1], [], []>} : vector<8x16xbf16>, vector<16x32xbf16>, vector<8x32xf32> -> vector<8x32xf32>
    %c4 = arith.constant 4 : index
    %c0_23 = arith.constant 0 : index
    %34 = vector.load %arg10[%c4, %c0_23] : memref<8x784xf32, #tpu.memory_space<vmem>>, vector<1x32xf32>
    %35 = vector.broadcast %34 : vector<1x32xf32> to vector<8x32xf32>
    %36 = arith.addf %33, %35 : vector<8x32xf32>
    %cst_24 = arith.constant 0.000000e+00 : f32
    %37 = vector.broadcast %cst_24 : f32 to vector<8x32xf32>
    %38 = arith.maximumf %36, %37 : vector<8x32xf32>
    %39 = arith.truncf %38 : vector<8x32xf32> to vector<8x32xbf16>
    %c0_25 = arith.constant 0 : index
    %c0_26 = arith.constant 0 : index
    %40 = vector.load %arg7[%c0_25, %c0_26] : memref<32x64xbf16, #tpu.memory_space<vmem>>, vector<32x64xbf16>
    %cst_27 = arith.constant dense<0.000000e+00> : vector<8x64xf32>
    %41 = tpu.matmul %39, %40, %cst_27 {dimension_numbers = #tpu.dot_dimension_numbers<[1], [0], [0], [1], [0, 0, 1, 1], [], []>} : vector<8x32xbf16>, vector<32x64xbf16>, vector<8x64xf32> -> vector<8x64xf32>
    %c5 = arith.constant 5 : index
    %c0_28 = arith.constant 0 : index
    %42 = vector.load %arg10[%c5, %c0_28] : memref<8x784xf32, #tpu.memory_space<vmem>>, vector<1x64xf32>
    %43 = vector.broadcast %42 : vector<1x64xf32> to vector<8x64xf32>
    %44 = arith.addf %41, %43 : vector<8x64xf32>
    %cst_29 = arith.constant 0.000000e+00 : f32
    %45 = vector.broadcast %cst_29 : f32 to vector<8x64xf32>
    %46 = arith.maximumf %44, %45 : vector<8x64xf32>
    %47 = arith.truncf %46 : vector<8x64xf32> to vector<8x64xbf16>
    %c0_30 = arith.constant 0 : index
    %c0_31 = arith.constant 0 : index
    %48 = vector.load %arg8[%c0_30, %c0_31] : memref<64x128xbf16, #tpu.memory_space<vmem>>, vector<64x128xbf16>
    %cst_32 = arith.constant dense<0.000000e+00> : vector<8x128xf32>
    %49 = tpu.matmul %47, %48, %cst_32 {dimension_numbers = #tpu.dot_dimension_numbers<[1], [0], [0], [1], [0, 0, 1, 1], [], []>} : vector<8x64xbf16>, vector<64x128xbf16>, vector<8x128xf32> -> vector<8x128xf32>
    %c6 = arith.constant 6 : index
    %c0_33 = arith.constant 0 : index
    %50 = vector.load %arg10[%c6, %c0_33] : memref<8x784xf32, #tpu.memory_space<vmem>>, vector<1x128xf32>
    %51 = vector.broadcast %50 : vector<1x128xf32> to vector<8x128xf32>
    %52 = arith.addf %49, %51 : vector<8x128xf32>
    %cst_34 = arith.constant 0.000000e+00 : f32
    %53 = vector.broadcast %cst_34 : f32 to vector<8x128xf32>
    %54 = arith.maximumf %52, %53 : vector<8x128xf32>
    %55 = arith.truncf %54 : vector<8x128xf32> to vector<8x128xbf16>
    %c0_35 = arith.constant 0 : index
    %c0_36 = arith.constant 0 : index
    %56 = vector.load %arg9[%c0_35, %c0_36] : memref<128x784xbf16, #tpu.memory_space<vmem>>, vector<128x784xbf16>
    %cst_37 = arith.constant dense<0.000000e+00> : vector<8x784xf32>
    %57 = tpu.matmul %55, %56, %cst_37 {dimension_numbers = #tpu.dot_dimension_numbers<[1], [0], [0], [1], [0, 0, 1, 1], [], []>} : vector<8x128xbf16>, vector<128x784xbf16>, vector<8x784xf32> -> vector<8x784xf32>
    %c7 = arith.constant 7 : index
    %c0_38 = arith.constant 0 : index
    %58 = vector.load %arg10[%c7, %c0_38] : memref<8x784xf32, #tpu.memory_space<vmem>>, vector<1x784xf32>
    %59 = vector.broadcast %58 : vector<1x784xf32> to vector<8x784xf32>
    %60 = arith.addf %57, %59 : vector<8x784xf32>
    %cst_39 = arith.constant 0.000000e+00 : f32
    %61 = vector.broadcast %cst_39 : f32 to vector<8x784xf32>
    %62 = arith.subf %61, %60 : vector<8x784xf32>
    %63 = math.exp %62 : vector<8x784xf32>
    %cst_40 = arith.constant 1.000000e+00 : f32
    %64 = vector.broadcast %cst_40 : f32 to vector<8x784xf32>
    %65 = arith.addf %64, %63 : vector<8x784xf32>
    %66 = tpu.reciprocal %65 {approx = true} : vector<8x784xf32> -> vector<8x784xf32>
    %c0_41 = arith.constant 0 : index
    %c0_42 = arith.constant 0 : index
    %67 = vector.load %arg11[%c0_41, %c0_42] : memref<8x784xf32, #tpu.memory_space<vmem>>, vector<8x784xf32>
    tpu.vector_store %arg11[%c0_41, %c0_42], %66 {strides = array<i32>} : memref<8x784xf32, #tpu.memory_space<vmem>>, vector<8x784xf32>,
    return
  }
  func.func @transform_0(%arg0: i32) -> (i32, i32) {
    %c0_i32 = arith.constant 0 : i32
    %c0_i32_0 = arith.constant 0 : i32
    return %arg0, %c0_i32 : i32, i32
  }
  func.func @transform_1(%arg0: i32) -> (i32, i32) {
    %c0_i32 = arith.constant 0 : i32
    %c0_i32_0 = arith.constant 0 : i32
    %c0_i32_1 = arith.constant 0 : i32
    return %c0_i32, %c0_i32_0 : i32, i32
  }
  func.func @transform_2(%arg0: i32) -> (i32, i32) {
    %c0_i32 = arith.constant 0 : i32
    %c0_i32_0 = arith.constant 0 : i32
    %c0_i32_1 = arith.constant 0 : i32
    return %c0_i32, %c0_i32_0 : i32, i32
  }
  func.func @transform_3(%arg0: i32) -> (i32, i32) {
    %c0_i32 = arith.constant 0 : i32
    %c0_i32_0 = arith.constant 0 : i32
    %c0_i32_1 = arith.constant 0 : i32
    return %c0_i32, %c0_i32_0 : i32, i32
  }
  func.func @transform_4(%arg0: i32) -> (i32, i32) {
    %c0_i32 = arith.constant 0 : i32
    %c0_i32_0 = arith.constant 0 : i32
    %c0_i32_1 = arith.constant 0 : i32
    return %c0_i32, %c0_i32_0 : i32, i32
  }
  func.func @transform_5(%arg0: i32) -> (i32, i32) {
    %c0_i32 = arith.constant 0 : i32
    %c0_i32_0 = arith.constant 0 : i32
    %c0_i32_1 = arith.constant 0 : i32
    return %c0_i32, %c0_i32_0 : i32, i32
  }
  func.func @transform_6(%arg0: i32) -> (i32, i32) {
    %c0_i32 = arith.constant 0 : i32
    %c0_i32_0 = arith.constant 0 : i32
    %c0_i32_1 = arith.constant 0 : i32
    return %c0_i32, %c0_i32_0 : i32, i32
  }
  func.func @transform_7(%arg0: i32) -> (i32, i32) {
    %c0_i32 = arith.constant 0 : i32
    %c0_i32_0 = arith.constant 0 : i32
    %c0_i32_1 = arith.constant 0 : i32
    return %c0_i32, %c0_i32_0 : i32, i32
  }
  func.func @transform_8(%arg0: i32) -> (i32, i32) {
    %c0_i32 = arith.constant 0 : i32
    %c0_i32_0 = arith.constant 0 : i32
    %c0_i32_1 = arith.constant 0 : i32
    return %c0_i32, %c0_i32_0 : i32, i32
  }
  func.func @transform_9(%arg0: i32) -> (i32, i32) {
    %c0_i32 = arith.constant 0 : i32
    %c0_i32_0 = arith.constant 0 : i32
    %c0_i32_1 = arith.constant 0 : i32
    return %c0_i32, %c0_i32_0 : i32, i32
  }
  func.func @transform_10(%arg0: i32) -> (i32, i32) {
    %c0_i32 = arith.constant 0 : i32
    %c0_i32_0 = arith.constant 0 : i32
    return %arg0, %c0_i32 : i32, i32
  }
}

</mosaic_0001>

<llo_original>
// kernel: tpu_custom_call.1
$region0: #{tpu_custom_call.1}
  #allocation0 [shape = 'u32[]', space=smem, size = 0x4, offset = 0x4, fixed_abs, tag = 'smem constant byte address 0x4 - core index']
  #allocation1 [shape = 'u32[144,128]{1,0:T(1,128)}', space=vmem, size = 0x12000, scoped, tag = 'internal scratch']
  %s0 = inlined_call_operand.vmem [shape: f32[8,784], index: 0, kind: input, shape index: {}]
  %s1 = inlined_call_operand.vmem [shape: bf16[784,128], index: 1, kind: input, shape index: {}]
  %s2 = inlined_call_operand.vmem [shape: bf16[128,64], index: 2, kind: input, shape index: {}]
  %s3 = inlined_call_operand.vmem [shape: bf16[64,32], index: 3, kind: input, shape index: {}]
  %s4 = inlined_call_operand.vmem [shape: bf16[32,16], index: 4, kind: input, shape index: {}]
  %s5 = inlined_call_operand.vmem [shape: bf16[16,32], index: 5, kind: input, shape index: {}]
  %s6 = inlined_call_operand.vmem [shape: bf16[32,64], index: 6, kind: input, shape index: {}]
  %s7 = inlined_call_operand.vmem [shape: bf16[64,128], index: 7, kind: input, shape index: {}]
  %s8 = inlined_call_operand.vmem [shape: bf16[128,784], index: 8, kind: input, shape index: {}]
  %s9 = inlined_call_operand.vmem [shape: f32[8,784], index: 9, kind: input, shape index: {}]
  %s10 = inlined_call_operand.hbm [shape: f32[8,784], index: 10, kind: output, shape index: {}]
  %s11 = sld [smem:[#allocation0]]
  $region50: #{tpu_custom_call.1} parent=0
    _
  %s13 = ssub.s32 1, %s11
  %s14 = scalar_select 0, %s13, %s11
  $region1: #{tpu_custom_call.1} parent=0
    #allocation2 [shape = 'u8[28672]{0}', space=vmem, size = 0x7000, scoped, tag = 'output window, operand 0, single buffered']
    #allocation3 [shape = 's32[1]{0}', space=sflag, size = 0x4, scoped, tag = 'scoped memory for tpu_custom_call.1']
    %15 = vsyncpa [#allocation3], 0
    // Predicated region
    $region2: #{tpu_custom_call.1} parent=1 // pred_check
      _
    $region3: #{tpu_custom_call.1} parent=1 // pred_check_branch
      %17 = sbr.rel (0) target = $region5
    $region4: #{tpu_custom_call.1} parent=1 // pred_region
      _
    $region5: #{tpu_custom_call.1} parent=1 // pred_fallthru
      _
    // Predicated region
    $region6: #{tpu_custom_call.1} parent=1 // pred_check
      _
    $region7: #{tpu_custom_call.1} parent=1 // pred_check_branch
      %19 = sbr.rel (0) target = $region9
    $region8: #{tpu_custom_call.1} parent=1 // pred_region
      _
    $region9: #{tpu_custom_call.1} parent=1 // pred_fallthru
      _
    // Predicated region
    $region10: #{tpu_custom_call.1} parent=1 // pred_check
      _
    $region11: #{tpu_custom_call.1} parent=1 // pred_check_branch
      %21 = sbr.rel (0) target = $region13
    $region12: #{tpu_custom_call.1} parent=1 // pred_region
      _
    $region13: #{tpu_custom_call.1} parent=1 // pred_fallthru
      _
    // Predicated region
    $region14: #{tpu_custom_call.1} parent=1 // pred_check
      _
    $region15: #{tpu_custom_call.1} parent=1 // pred_check_branch
      %23 = sbr.rel (0) target = $region17
    $region16: #{tpu_custom_call.1} parent=1 // pred_region
      _
    $region17: #{tpu_custom_call.1} parent=1 // pred_fallthru
      _
    // Predicated region
    $region18: #{tpu_custom_call.1} parent=1 // pred_check
      _
    $region19: #{tpu_custom_call.1} parent=1 // pred_check_branch
      %25 = sbr.rel (0) target = $region21
    $region20: #{tpu_custom_call.1} parent=1 // pred_region
      _
    $region21: #{tpu_custom_call.1} parent=1 // pred_fallthru
      _
    // Predicated region
    $region22: #{tpu_custom_call.1} parent=1 // pred_check
      _
    $region23: #{tpu_custom_call.1} parent=1 // pred_check_branch
      %27 = sbr.rel (0) target = $region25
    $region24: #{tpu_custom_call.1} parent=1 // pred_region
      _
    $region25: #{tpu_custom_call.1} parent=1 // pred_fallthru
      _
    // Predicated region
    $region26: #{tpu_custom_call.1} parent=1 // pred_check
      _
    $region27: #{tpu_custom_call.1} parent=1 // pred_check_branch
      %29 = sbr.rel (0) target = $region29
    $region28: #{tpu_custom_call.1} parent=1 // pred_region
      _
    $region29: #{tpu_custom_call.1} parent=1 // pred_fallthru
      _
    // Predicated region
    $region30: #{tpu_custom_call.1} parent=1 // pred_check
      _
    $region31: #{tpu_custom_call.1} parent=1 // pred_check_branch
      %31 = sbr.rel (0) target = $region33
    $region32: #{tpu_custom_call.1} parent=1 // pred_region
      _
    $region33: #{tpu_custom_call.1} parent=1 // pred_fallthru
      _
    // Predicated region
    $region34: #{tpu_custom_call.1} parent=1 // pred_check
      _
    $region35: #{tpu_custom_call.1} parent=1 // pred_check_branch
      %33 = sbr.rel (0) target = $region37
    $region36: #{tpu_custom_call.1} parent=1 // pred_region
      _
    $region37: #{tpu_custom_call.1} parent=1 // pred_fallthru
      _
    // Predicated region
    $region38: #{tpu_custom_call.1} parent=1 // pred_check
      _
    $region39: #{tpu_custom_call.1} parent=1 // pred_check_branch
      %35 = sbr.rel (0) target = $region41
    $region40: #{tpu_custom_call.1} parent=1 // pred_region
      _
    $region41: #{tpu_custom_call.1} parent=1 // pred_fallthru
      _
    %v37 = vld [vmem:[%s0] sm:$0xff]
    %v38 = vld [vmem:[%s0 + $0x8] sm:$0xff]
    %v39 = vld [vmem:[%s0 + $0x10] sm:$0xff]
    %v40 = vld [vmem:[%s0 + $0x18] sm:$0xff]
    %v41 = vld [vmem:[%s0 + $0x20] sm:$0xff]
    %v42 = vld [vmem:[%s0 + $0x28] sm:$0xff]
    %v43 = vld [vmem:[%s0 + $0x30] sm:$0xff]
    %v44 = vpack.c.bf16 %v37, %v37
    %v45 = vpack.c.bf16 %v38, %v38
    %v46 = vpack.c.bf16 %v39, %v39
    %v47 = vpack.c.bf16 %v40, %v40
    %v48 = vpack.c.bf16 %v41, %v41
    %v49 = vpack.c.bf16 %v42, %v42
    %v50 = vpack.c.bf16 %v43, %v43
    %v51 = vld [vmem:[%s1] sm:$0xf]
    %v52 = vld [vmem:[%s1 + $0x4] sm:$0xf]
    %v53 = vld [vmem:[%s1 + $0x8] sm:$0xf]
    %v54 = vld [vmem:[%s1 + $0xc] sm:$0xf]
    %v55 = vld [vmem:[%s1 + $0x10] sm:$0xf]
    %v56 = vld [vmem:[%s1 + $0x14] sm:$0xf]
    %v57 = vld [vmem:[%s1 + $0x18] sm:$0xf]
    %v58 = vld [vmem:[%s1 + $0x1c] sm:$0xf]
    %v59 = vld [vmem:[%s1 + $0x20] sm:$0xf]
    %v60 = vld [vmem:[%s1 + $0x24] sm:$0xf]
    %v61 = vld [vmem:[%s1 + $0x28] sm:$0xf]
    %v62 = vld [vmem:[%s1 + $0x2c] sm:$0xf]
    %v63 = vld [vmem:[%s1 + $0x30] sm:$0xf]
    %v64 = vld [vmem:[%s1 + $0x34] sm:$0xf]
    %v65 = vld [vmem:[%s1 + $0x38] sm:$0xf]
    %v66 = vld [vmem:[%s1 + $0x3c] sm:$0xf]
    %v67 = vld [vmem:[%s1 + $0x40] sm:$0xf]
    %v68 = vld [vmem:[%s1 + $0x44] sm:$0xf]
    %v69 = vld [vmem:[%s1 + $0x48] sm:$0xf]
    %v70 = vld [vmem:[%s1 + $0x4c] sm:$0xf]
    %v71 = vld [vmem:[%s1 + $0x50] sm:$0xf]
    %v72 = vld [vmem:[%s1 + $0x54] sm:$0xf]
    %v73 = vld [vmem:[%s1 + $0x58] sm:$0xf]
    %v74 = vld [vmem:[%s1 + $0x5c] sm:$0xf]
    %v75 = vld [vmem:[%s1 + $0x60] sm:$0xf]
    %v76 = vld [vmem:[%s1 + $0x64] sm:$0xf]
    %v77 = vld [vmem:[%s1 + $0x68] sm:$0xf]
    %v78 = vld [vmem:[%s1 + $0x6c] sm:$0xf]
    %v79 = vld [vmem:[%s1 + $0x70] sm:$0xf]
    %v80 = vld [vmem:[%s1 + $0x74] sm:$0xf]
    %v81 = vld [vmem:[%s1 + $0x78] sm:$0xf]
    %v82 = vld [vmem:[%s1 + $0x7c] sm:$0xf]
    %v83 = vld [vmem:[%s1 + $0x80] sm:$0xf]
    %v84 = vld [vmem:[%s1 + $0x84] sm:$0xf]
    %v85 = vld [vmem:[%s1 + $0x88] sm:$0xf]
    %v86 = vld [vmem:[%s1 + $0x8c] sm:$0xf]
    %v87 = vld [vmem:[%s1 + $0x90] sm:$0xf]
    %v88 = vld [vmem:[%s1 + $0x94] sm:$0xf]
    %v89 = vld [vmem:[%s1 + $0x98] sm:$0xf]
    %v90 = vld [vmem:[%s1 + $0x9c] sm:$0xf]
    %v91 = vld [vmem:[%s1 + $0xa0] sm:$0xf]
    %v92 = vld [vmem:[%s1 + $0xa4] sm:$0xf]
    %v93 = vld [vmem:[%s1 + $0xa8] sm:$0xf]
    %v94 = vld [vmem:[%s1 + $0xac] sm:$0xf]
    %v95 = vld [vmem:[%s1 + $0xb0] sm:$0xf]
    %v96 = vld [vmem:[%s1 + $0xb4] sm:$0xf]
    %v97 = vld [vmem:[%s1 + $0xb8] sm:$0xf]
    %v98 = vld [vmem:[%s1 + $0xbc] sm:$0xf]
    %v99 = vld [vmem:[%s1 + $0xc0] sm:$0xf]
    %v100 = vld [vmem:[%s1 + $0xc4] sm:$0xf]
    %v101 = vld [vmem:[%s1 + $0xc8] sm:$0xf]
    %v102 = vld [vmem:[%s1 + $0xcc] sm:$0xf]
    %v103 = vld [vmem:[%s1 + $0xd0] sm:$0xf]
    %v104 = vld [vmem:[%s1 + $0xd4] sm:$0xf]
    %v105 = vld [vmem:[%s1 + $0xd8] sm:$0xf]
    %v106 = vld [vmem:[%s1 + $0xdc] sm:$0xf]
    %v107 = vld [vmem:[%s1 + $0xe0] sm:$0xf]
    %v108 = vld [vmem:[%s1 + $0xe4] sm:$0xf]
    %v109 = vld [vmem:[%s1 + $0xe8] sm:$0xf]
    %v110 = vld [vmem:[%s1 + $0xec] sm:$0xf]
    %v111 = vld [vmem:[%s1 + $0xf0] sm:$0xf]
    %v112 = vld [vmem:[%s1 + $0xf4] sm:$0xf]
    %v113 = vld [vmem:[%s1 + $0xf8] sm:$0xf]
    %v114 = vld [vmem:[%s1 + $0xfc] sm:$0xf]
    %v115 = vld [vmem:[%s1 + $0x100] sm:$0xf]
    %v116 = vld [vmem:[%s1 + $0x104] sm:$0xf]
    %v117 = vld [vmem:[%s1 + $0x108] sm:$0xf]
    %v118 = vld [vmem:[%s1 + $0x10c] sm:$0xf]
    %v119 = vld [vmem:[%s1 + $0x110] sm:$0xf]
    %v120 = vld [vmem:[%s1 + $0x114] sm:$0xf]
    %v121 = vld [vmem:[%s1 + $0x118] sm:$0xf]
    %v122 = vld [vmem:[%s1 + $0x11c] sm:$0xf]
    %v123 = vld [vmem:[%s1 + $0x120] sm:$0xf]
    %v124 = vld [vmem:[%s1 + $0x124] sm:$0xf]
    %v125 = vld [vmem:[%s1 + $0x128] sm:$0xf]
    %v126 = vld [vmem:[%s1 + $0x12c] sm:$0xf]
    %v127 = vld [vmem:[%s1 + $0x130] sm:$0xf]
    %v128 = vld [vmem:[%s1 + $0x134] sm:$0xf]
    %v129 = vld [vmem:[%s1 + $0x138] sm:$0xf]
    %v130 = vld [vmem:[%s1 + $0x13c] sm:$0xf]
    %v131 = vld [vmem:[%s1 + $0x140] sm:$0xf]
    %v132 = vld [vmem:[%s1 + $0x144] sm:$0xf]
    %v133 = vld [vmem:[%s1 + $0x148] sm:$0xf]
    %v134 = vld [vmem:[%s1 + $0x14c] sm:$0xf]
    %v135 = vld [vmem:[%s1 + $0x150] sm:$0xf]
    %v136 = vld [vmem:[%s1 + $0x154] sm:$0xf]
    %v137 = vld [vmem:[%s1 + $0x158] sm:$0xf]
    %v138 = vld [vmem:[%s1 + $0x15c] sm:$0xf]
    %v139 = vld [vmem:[%s1 + $0x160] sm:$0xf]
    %v140 = vld [vmem:[%s1 + $0x164] sm:$0xf]
    %v141 = vld [vmem:[%s1 + $0x168] sm:$0xf]
    %v142 = vld [vmem:[%s1 + $0x16c] sm:$0xf]
    %v143 = vld [vmem:[%s1 + $0x170] sm:$0xf]
    %v144 = vld [vmem:[%s1 + $0x174] sm:$0xf]
    %v145 = vld [vmem:[%s1 + $0x178] sm:$0xf]
    %v146 = vld [vmem:[%s1 + $0x17c] sm:$0xf]
    %v147 = vld [vmem:[%s1 + $0x180] sm:$0xf]
    %v148 = vld [vmem:[%s1 + $0x184] sm:$0xf]
    %v149 = vld [vmem:[%s9] ss:$0 sm:$0xff]
    %v248 = vunpack.c.l.b16 %v51
    %v249 = vunpack.c.l.b16 %v52
    %v250 = vunpack.c.l.b16 %v53
    %v251 = vunpack.c.l.b16 %v54
    %v252 = vunpack.c.l.b16 %v55
    %v253 = vunpack.c.l.b16 %v56
    %v254 = vunpack.c.l.b16 %v57
    %v255 = vunpack.c.l.b16 %v58
    %v256 = vunpack.c.l.b16 %v59
    %v257 = vunpack.c.l.b16 %v60
    %v258 = vunpack.c.l.b16 %v61
    %v259 = vunpack.c.l.b16 %v62
    %v260 = vunpack.c.l.b16 %v63
    %v261 = vunpack.c.l.b16 %v64
    %v262 = vunpack.c.l.b16 %v65
    %v263 = vunpack.c.l.b16 %v66
    %v264 = vunpack.c.l.b16 %v67
    %v265 = vunpack.c.l.b16 %v68
    %v266 = vunpack.c.l.b16 %v69
    %v267 = vunpack.c.l.b16 %v70
    %v268 = vunpack.c.l.b16 %v71
    %v269 = vunpack.c.l.b16 %v72
    %v270 = vunpack.c.l.b16 %v73
    %v271 = vunpack.c.l.b16 %v74
    %v272 = vunpack.c.l.b16 %v75
    %v273 = vunpack.c.l.b16 %v76
    %v274 = vunpack.c.l.b16 %v77
    %v275 = vunpack.c.l.b16 %v78
    %v276 = vunpack.c.l.b16 %v79
    %v277 = vunpack.c.l.b16 %v80
    %v278 = vunpack.c.l.b16 %v81
    %v279 = vunpack.c.l.b16 %v82
    %v280 = vunpack.c.l.b16 %v83
    %v281 = vunpack.c.l.b16 %v84
    %v282 = vunpack.c.l.b16 %v85
    %v283 = vunpack.c.l.b16 %v86
    %v284 = vunpack.c.l.b16 %v87
    %v285 = vunpack.c.l.b16 %v88
    %v286 = vunpack.c.l.b16 %v89
    %v287 = vunpack.c.l.b16 %v90
    %v288 = vunpack.c.l.b16 %v91
    %v289 = vunpack.c.l.b16 %v92
    %v290 = vunpack.c.l.b16 %v93
    %v291 = vunpack.c.l.b16 %v94
    %v292 = vunpack.c.l.b16 %v95
    %v293 = vunpack.c.l.b16 %v96
    %v294 = vunpack.c.l.b16 %v97
    %v295 = vunpack.c.l.b16 %v98
    %v296 = vunpack.c.l.b16 %v99
    %v297 = vunpack.c.l.b16 %v100
    %v298 = vunpack.c.l.b16 %v101
    %v299 = vunpack.c.l.b16 %v102
    %v300 = vunpack.c.l.b16 %v103
    %v301 = vunpack.c.l.b16 %v104
    %v302 = vunpack.c.l.b16 %v105
    %v303 = vunpack.c.l.b16 %v106
    %v304 = vunpack.c.l.b16 %v107
    %v305 = vunpack.c.l.b16 %v108
    %v306 = vunpack.c.l.b16 %v109
    %v307 = vunpack.c.l.b16 %v110
    %v308 = vunpack.c.l.b16 %v111
    %v309 = vunpack.c.l.b16 %v112
    %v310 = vunpack.c.l.b16 %v113
    %v311 = vunpack.c.l.b16 %v114
    %v312 = vunpack.c.l.b16 %v115
    %v313 = vunpack.c.l.b16 %v116
    %v314 = vunpack.c.l.b16 %v117
    %v315 = vunpack.c.l.b16 %v118
    %v316 = vunpack.c.l.b16 %v119
    %v317 = vunpack.c.l.b16 %v120
    %v318 = vunpack.c.l.b16 %v121
    %v319 = vunpack.c.l.b16 %v122
    %v320 = vunpack.c.l.b16 %v123
    %v321 = vunpack.c.l.b16 %v124
    %v322 = vunpack.c.l.b16 %v125
    %v323 = vunpack.c.l.b16 %v126
    %v324 = vunpack.c.l.b16 %v127
    %v325 = vunpack.c.l.b16 %v128
    %v326 = vunpack.c.l.b16 %v129
    %v327 = vunpack.c.l.b16 %v130
    %v328 = vunpack.c.l.b16 %v131
    %v329 = vunpack.c.l.b16 %v132
    %v330 = vunpack.c.l.b16 %v133
    %v331 = vunpack.c.l.b16 %v134
    %v332 = vunpack.c.l.b16 %v135
    %v333 = vunpack.c.l.b16 %v136
    %v334 = vunpack.c.l.b16 %v137
    %v335 = vunpack.c.l.b16 %v138
    %v336 = vunpack.c.l.b16 %v139
    %v337 = vunpack.c.l.b16 %v140
    %v338 = vunpack.c.l.b16 %v141
    %v339 = vunpack.c.l.b16 %v142
    %v340 = vunpack.c.l.b16 %v143
    %v341 = vunpack.c.l.b16 %v144
    %v342 = vunpack.c.l.b16 %v145
    %v343 = vunpack.c.l.b16 %v146
    %v344 = vunpack.c.l.b16 %v147
    %v345 = vunpack.c.l.b16 %v148
    %v346 = vpack.c.b16 %v249, %v248
    %v347 = vpack.c.b16 %v251, %v250
    %v348 = vpack.c.b16 %v253, %v252
    %v349 = vpack.c.b16 %v255, %v254
    %v350 = vpack.c.b16 %v257, %v256
    %v351 = vpack.c.b16 %v259, %v258
    %v352 = vpack.c.b16 %v261, %v260
    %v353 = vpack.c.b16 %v263, %v262
    %v354 = vpack.c.b16 %v265, %v264
    %v355 = vpack.c.b16 %v267, %v266
    %v356 = vpack.c.b16 %v269, %v268
    %v357 = vpack.c.b16 %v271, %v270
    %v358 = vpack.c.b16 %v273, %v272
    %v359 = vpack.c.b16 %v275, %v274
    %v360 = vpack.c.b16 %v277, %v276
    %v361 = vpack.c.b16 %v279, %v278
    %v362 = vpack.c.b16 %v281, %v280
    %v363 = vpack.c.b16 %v283, %v282
    %v364 = vpack.c.b16 %v285, %v284
    %v365 = vpack.c.b16 %v287, %v286
    %v366 = vpack.c.b16 %v289, %v288
    %v367 = vpack.c.b16 %v291, %v290
    %v368 = vpack.c.b16 %v293, %v292
    %v369 = vpack.c.b16 %v295, %v294
    %v370 = vpack.c.b16 %v297, %v296
    %v371 = vpack.c.b16 %v299, %v298
    %v372 = vpack.c.b16 %v301, %v300
    %v373 = vpack.c.b16 %v303, %v302
    %v374 = vpack.c.b16 %v305, %v304
    %v375 = vpack.c.b16 %v307, %v306
    %v376 = vpack.c.b16 %v309, %v308
    %v377 = vpack.c.b16 %v311, %v310
    %v378 = vpack.c.b16 %v313, %v312
    %v379 = vpack.c.b16 %v315, %v314
    %v380 = vpack.c.b16 %v317, %v316
    %v381 = vpack.c.b16 %v319, %v318
    %v382 = vpack.c.b16 %v321, %v320
    %v383 = vpack.c.b16 %v323, %v322
    %v384 = vpack.c.b16 %v325, %v324
    %v385 = vpack.c.b16 %v327, %v326
    %v386 = vpack.c.b16 %v329, %v328
    %v387 = vpack.c.b16 %v331, %v330
    %v388 = vpack.c.b16 %v333, %v332
    %v389 = vpack.c.b16 %v335, %v334
    %v390 = vpack.c.b16 %v337, %v336
    %v391 = vpack.c.b16 %v339, %v338
    %v392 = vpack.c.b16 %v341, %v340
    %v393 = vpack.c.b16 %v343, %v342
    %v394 = vpack.c.b16 %v345, %v344
    %vm444 = vcmask 130048
    %v446 = vsel %vm444, %v50, 0
    %448 = vmatprep.subr.bf16.mxu0 0
    %449 = vmatpush1.bf16.msra.mxu0 %v353
    %450 = vmatprep.subr.bf16.mxu0 0
    %451 = vmatpush1.bf16.msra.mxu0 %v352
    %452 = vmatprep.subr.bf16.mxu0 0
    %453 = vmatpush1.bf16.msra.mxu0 %v351
    %454 = vmatprep.subr.bf16.mxu0 0
    %455 = vmatpush1.bf16.msra.mxu0 %v350
    %456 = vmatprep.subr.bf16.mxu0 0
    %457 = vmatpush1.bf16.msra.mxu0 %v349
    %458 = vmatprep.subr.bf16.mxu0 0
    %459 = vmatpush1.bf16.msra.mxu0 %v348
    %460 = vmatprep.subr.bf16.mxu0 0
    %461 = vmatpush1.bf16.msra.mxu0 %v347
    %462 = vmatprep.subr.bf16.mxu0 0
    %463 = vmatpush1.bf16.msra.mxu0 %v346
    %464 = vmatprep.subr.bf16.mxu0 0
    %465 = vmatpush2.bf16.msra.mxu0 %v361
    %466 = vmatprep.subr.bf16.mxu0 0
    %467 = vmatpush2.bf16.msra.mxu0 %v360
    %468 = vmatprep.subr.bf16.mxu0 0
    %469 = vmatpush2.bf16.msra.mxu0 %v359
    %470 = vmatprep.subr.bf16.mxu0 0
    %471 = vmatpush2.bf16.msra.mxu0 %v358
    %472 = vmatprep.subr.bf16.mxu0 0
    %473 = vmatpush2.bf16.msra.mxu0 %v357
    %474 = vmatprep.subr.bf16.mxu0 0
    %475 = vmatpush2.bf16.msra.mxu0 %v356
    %476 = vmatprep.subr.bf16.mxu0 0
    %477 = vmatpush2.bf16.msra.mxu0 %v355
    %478 = vmatprep.subr.bf16.mxu0 0
    %479 = vmatpush2.bf16.msra.mxu0 %v354
    %480 = vmatprep.mubr.bf16.mxu0 %v45
    %481 = vmatmul.mubr.bf16.gmra.mxu0 %v44
    %v482 = vpop.f32.mrf.mxu0
    %v483 = vadd.f32 %v149, %v482
    %v484 = vpop.f32.mrf.mxu0
    %v485 = vpop.f32.mrf.mxu0
    %v486 = vpop.f32.mrf.mxu0
    %487 = vdwg.mxu0
    %488 = vmatprep.subr.bf16.mxu0 0
    %489 = vmatpush1.bf16.msra.mxu0 %v369
    %490 = vmatprep.subr.bf16.mxu0 0
    %491 = vmatpush1.bf16.msra.mxu0 %v368
    %492 = vmatprep.subr.bf16.mxu0 0
    %493 = vmatpush1.bf16.msra.mxu0 %v367
    %494 = vmatprep.subr.bf16.mxu0 0
    %495 = vmatpush1.bf16.msra.mxu0 %v366
    %496 = vmatprep.subr.bf16.mxu0 0
    %497 = vmatpush1.bf16.msra.mxu0 %v365
    %498 = vmatprep.subr.bf16.mxu0 0
    %499 = vmatpush1.bf16.msra.mxu0 %v364
    %500 = vmatprep.subr.bf16.mxu0 0
    %501 = vmatpush1.bf16.msra.mxu0 %v363
    %502 = vmatprep.subr.bf16.mxu0 0
    %503 = vmatpush1.bf16.msra.mxu0 %v362
    %504 = vmatprep.subr.bf16.mxu0 0
    %505 = vmatpush2.bf16.msra.mxu0 %v377
    %506 = vmatprep.subr.bf16.mxu0 0
    %507 = vmatpush2.bf16.msra.mxu0 %v376
    %508 = vmatprep.subr.bf16.mxu0 0
    %509 = vmatpush2.bf16.msra.mxu0 %v375
    %510 = vmatprep.subr.bf16.mxu0 0
    %511 = vmatpush2.bf16.msra.mxu0 %v374
    %512 = vmatprep.subr.bf16.mxu0 0
    %513 = vmatpush2.bf16.msra.mxu0 %v373
    %514 = vmatprep.subr.bf16.mxu0 0
    %515 = vmatpush2.bf16.msra.mxu0 %v372
    %516 = vmatprep.subr.bf16.mxu0 0
    %517 = vmatpush2.bf16.msra.mxu0 %v371
    %518 = vmatprep.subr.bf16.mxu0 0
    %519 = vmatpush2.bf16.msra.mxu0 %v370
    %520 = vmatprep.mubr.bf16.mxu0 %v47
    %521 = vmatmul.mubr.bf16.gmra.mxu0 %v46
    %v522 = vpop.f32.mrf.mxu0
    %v523 = vadd.f32 %v483, %v522
    %v524 = vpop.f32.mrf.mxu0
    %v525 = vpop.f32.mrf.mxu0
    %v526 = vpop.f32.mrf.mxu0
    %527 = vdwg.mxu0
    %528 = vmatprep.subr.bf16.mxu0 0
    %529 = vmatpush1.bf16.msra.mxu0 %v385
    %530 = vmatprep.subr.bf16.mxu0 0
    %531 = vmatpush1.bf16.msra.mxu0 %v384
    %532 = vmatprep.subr.bf16.mxu0 0
    %533 = vmatpush1.bf16.msra.mxu0 %v383
    %534 = vmatprep.subr.bf16.mxu0 0
    %535 = vmatpush1.bf16.msra.mxu0 %v382
    %536 = vmatprep.subr.bf16.mxu0 0
    %537 = vmatpush1.bf16.msra.mxu0 %v381
    %538 = vmatprep.subr.bf16.mxu0 0
    %539 = vmatpush1.bf16.msra.mxu0 %v380
    %540 = vmatprep.subr.bf16.mxu0 0
    %541 = vmatpush1.bf16.msra.mxu0 %v379
    %542 = vmatprep.subr.bf16.mxu0 0
    %543 = vmatpush1.bf16.msra.mxu0 %v378
    %544 = vmatprep.subr.bf16.mxu0 0
    %545 = vmatpush2.bf16.msra.mxu0 %v393
    %546 = vmatprep.subr.bf16.mxu0 0
    %547 = vmatpush2.bf16.msra.mxu0 %v392
    %548 = vmatprep.subr.bf16.mxu0 0
    %549 = vmatpush2.bf16.msra.mxu0 %v391
    %550 = vmatprep.subr.bf16.mxu0 0
    %551 = vmatpush2.bf16.msra.mxu0 %v390
    %552 = vmatprep.subr.bf16.mxu0 0
    %553 = vmatpush2.bf16.msra.mxu0 %v389
    %554 = vmatprep.subr.bf16.mxu0 0
    %555 = vmatpush2.bf16.msra.mxu0 %v388
    %556 = vmatprep.subr.bf16.mxu0 0
    %557 = vmatpush2.bf16.msra.mxu0 %v387
    %558 = vmatprep.subr.bf16.mxu0 0
    %559 = vmatpush2.bf16.msra.mxu0 %v386
    %560 = vmatprep.mubr.bf16.mxu0 %v49
    %561 = vmatmul.mubr.bf16.gmra.mxu0 %v48
    %v562 = vpop.f32.mrf.mxu0
    %v563 = vadd.f32 %v523, %v562
    %v564 = vpop.f32.mrf.mxu0
    %v565 = vpop.f32.mrf.mxu0
    %v566 = vpop.f32.mrf.mxu0
    %567 = vdwg.mxu0
    %568 = vmatprep.subr.bf16.mxu0 0
    %569 = vmatpush1.bf16.msra.mxu0 0
    %570 = vmatprep.subr.bf16.mxu0 0
    %571 = vmatpush1.bf16.msra.mxu0 0
    %572 = vmatprep.subr.bf16.mxu0 0
    %573 = vmatpush1.bf16.msra.mxu0 0
    %574 = vmatprep.subr.bf16.mxu0 0
    %575 = vmatpush1.bf16.msra.mxu0 0
    %576 = vmatprep.subr.bf16.mxu0 0
    %577 = vmatpush1.bf16.msra.mxu0 0
    %578 = vmatprep.subr.bf16.mxu0 0
    %579 = vmatpush1.bf16.msra.mxu0 0
    %580 = vmatprep.subr.bf16.mxu0 0
    %581 = vmatpush1.bf16.msra.mxu0 0
    %582 = vmatprep.subr.bf16.mxu0 0
    %583 = vmatpush1.bf16.msra.mxu0 %v394
    %584 = vmatprep.subr.bf16.mxu0 0
    %585 = vmatpush2.bf16.msra.mxu0 0
    %586 = vmatprep.subr.bf16.mxu0 0
    %587 = vmatpush2.bf16.msra.mxu0 0
    %588 = vmatprep.subr.bf16.mxu0 0
    %589 = vmatpush2.bf16.msra.mxu0 0
    %590 = vmatprep.subr.bf16.mxu0 0
    %591 = vmatpush2.bf16.msra.mxu0 0
    %592 = vmatprep.subr.bf16.mxu0 0
    %593 = vmatpush2.bf16.msra.mxu0 0
    %594 = vmatprep.subr.bf16.mxu0 0
    %595 = vmatpush2.bf16.msra.mxu0 0
    %596 = vmatprep.subr.bf16.mxu0 0
    %597 = vmatpush2.bf16.msra.mxu0 0
    %598 = vmatprep.subr.bf16.mxu0 0
    %599 = vmatpush2.bf16.msra.mxu0 0
    %600 = vmatprep.mubr.bf16.mxu0 0
    %601 = vmatmul.mubr.bf16.gmra.mxu0 %v446
    %v602 = vpop.f32.mrf.mxu0
    %v603 = vadd.f32 %v563, %v602
    %v604 = vpop.f32.mrf.mxu0
    %v605 = vpop.f32.mrf.mxu0
    %v606 = vpop.f32.mrf.mxu0
    %607 = vdwg.mxu0
    %v608 = vmax.f32 %v603, 0.0
    %v609 = vpack.c.bf16 %v608, %v608
    %v610 = vld [vmem:[%s2] sm:$0xf]
    %v611 = vld [vmem:[%s2 + $0x4] sm:$0xf]
    %v612 = vld [vmem:[%s2 + $0x8] sm:$0xf]
    %v613 = vld [vmem:[%s2 + $0xc] sm:$0xf]
    %v614 = vld [vmem:[%s2 + $0x10] sm:$0xf]
    %v615 = vld [vmem:[%s2 + $0x14] sm:$0xf]
    %v616 = vld [vmem:[%s2 + $0x18] sm:$0xf]
    %v617 = vld [vmem:[%s2 + $0x1c] sm:$0xf]
    %v618 = vld [vmem:[%s2 + $0x20] sm:$0xf]
    %v619 = vld [vmem:[%s2 + $0x24] sm:$0xf]
    %v620 = vld [vmem:[%s2 + $0x28] sm:$0xf]
    %v621 = vld [vmem:[%s2 + $0x2c] sm:$0xf]
    %v622 = vld [vmem:[%s2 + $0x30] sm:$0xf]
    %v623 = vld [vmem:[%s2 + $0x34] sm:$0xf]
    %v624 = vld [vmem:[%s2 + $0x38] sm:$0xf]
    %v625 = vld [vmem:[%s2 + $0x3c] sm:$0xf]
    %v626 = vld [vmem:[%s9 + $0x1] ss:$0 sm:$0xff]
    %v643 = vunpack.c.l.b16 %v610
    %v644 = vunpack.c.l.b16 %v611
    %v645 = vunpack.c.l.b16 %v612
    %v646 = vunpack.c.l.b16 %v613
    %v647 = vunpack.c.l.b16 %v614
    %v648 = vunpack.c.l.b16 %v615
    %v649 = vunpack.c.l.b16 %v616
    %v650 = vunpack.c.l.b16 %v617
    %v651 = vunpack.c.l.b16 %v618
    %v652 = vunpack.c.l.b16 %v619
    %v653 = vunpack.c.l.b16 %v620
    %v654 = vunpack.c.l.b16 %v621
    %v655 = vunpack.c.l.b16 %v622
    %v656 = vunpack.c.l.b16 %v623
    %v657 = vunpack.c.l.b16 %v624
    %v658 = vunpack.c.l.b16 %v625
    %v659 = vpack.c.b16 %v644, %v643
    %v660 = vpack.c.b16 %v646, %v645
    %v661 = vpack.c.b16 %v648, %v647
    %v662 = vpack.c.b16 %v650, %v649
    %v663 = vpack.c.b16 %v652, %v651
    %v664 = vpack.c.b16 %v654, %v653
    %v665 = vpack.c.b16 %v656, %v655
    %v666 = vpack.c.b16 %v658, %v657
    %675 = vmatprep.subr.bf16.mxu0 0
    %676 = vmatpush1.bf16.msra.mxu0 %v666
    %677 = vmatprep.subr.bf16.mxu0 0
    %678 = vmatpush1.bf16.msra.mxu0 %v665
    %679 = vmatprep.subr.bf16.mxu0 0
    %680 = vmatpush1.bf16.msra.mxu0 %v664
    %681 = vmatprep.subr.bf16.mxu0 0
    %682 = vmatpush1.bf16.msra.mxu0 %v663
    %683 = vmatprep.subr.bf16.mxu0 0
    %684 = vmatpush1.bf16.msra.mxu0 %v662
    %685 = vmatprep.subr.bf16.mxu0 0
    %686 = vmatpush1.bf16.msra.mxu0 %v661
    %687 = vmatprep.subr.bf16.mxu0 0
    %688 = vmatpush1.bf16.msra.mxu0 %v660
    %689 = vmatprep.subr.bf16.mxu0 0
    %690 = vmatpush1.bf16.msra.mxu0 %v659
    %691 = vmatprep.subr.bf16.mxu0 0
    %692 = vmatpush2.bf16.msra.mxu0 0
    %693 = vmatprep.subr.bf16.mxu0 0
    %694 = vmatpush2.bf16.msra.mxu0 0
    %695 = vmatprep.subr.bf16.mxu0 0
    %696 = vmatpush2.bf16.msra.mxu0 0
    %697 = vmatprep.subr.bf16.mxu0 0
    %698 = vmatpush2.bf16.msra.mxu0 0
    %699 = vmatprep.subr.bf16.mxu0 0
    %700 = vmatpush2.bf16.msra.mxu0 0
    %701 = vmatprep.subr.bf16.mxu0 0
    %702 = vmatpush2.bf16.msra.mxu0 0
    %703 = vmatprep.subr.bf16.mxu0 0
    %704 = vmatpush2.bf16.msra.mxu0 0
    %705 = vmatprep.subr.bf16.mxu0 0
    %706 = vmatpush2.bf16.msra.mxu0 0
    %707 = vmatprep.mubr.bf16.mxu0 0
    %708 = vmatmul.mubr.bf16.gmra.mxu0 %v609
    %v709 = vpop.f32.mrf.mxu0
    %v710 = vadd.f32 %v626, %v709
    %v711 = vpop.f32.mrf.mxu0
    %v712 = vpop.f32.mrf.mxu0
    %v713 = vpop.f32.mrf.mxu0
    %714 = vdwg.mxu0
    %v715 = vmax.f32 %v710, 0.0
    %v716 = vpack.c.bf16 %v715, %v715
    %v717 = vld [vmem:[%s3] sm:$0xf]
    %v718 = vld [vmem:[%s3 + $0x4] sm:$0xf]
    %v719 = vld [vmem:[%s3 + $0x8] sm:$0xf]
    %v720 = vld [vmem:[%s3 + $0xc] sm:$0xf]
    %v721 = vld [vmem:[%s3 + $0x10] sm:$0xf]
    %v722 = vld [vmem:[%s3 + $0x14] sm:$0xf]
    %v723 = vld [vmem:[%s3 + $0x18] sm:$0xf]
    %v724 = vld [vmem:[%s3 + $0x1c] sm:$0xf]
    %v725 = vld [vmem:[%s9 + $0x2] ss:$0 sm:$0xff]
    %v734 = vunpack.c.l.b16 %v717
    %v735 = vunpack.c.l.b16 %v718
    %v736 = vunpack.c.l.b16 %v719
    %v737 = vunpack.c.l.b16 %v720
    %v738 = vunpack.c.l.b16 %v721
    %v739 = vunpack.c.l.b16 %v722
    %v740 = vunpack.c.l.b16 %v723
    %v741 = vunpack.c.l.b16 %v724
    %v742 = vpack.c.b16 %v735, %v734
    %v743 = vpack.c.b16 %v737, %v736
    %v744 = vpack.c.b16 %v739, %v738
    %v745 = vpack.c.b16 %v741, %v740
    %vm750 = vcmask 523264
    %v752 = vsel %vm750, %v716, 0
    %754 = vmatprep.subr.bf16.mxu0 0
    %755 = vmatpush1.bf16.msra.mxu0 0
    %756 = vmatprep.subr.bf16.mxu0 0
    %757 = vmatpush1.bf16.msra.mxu0 0
    %758 = vmatprep.subr.bf16.mxu0 0
    %759 = vmatpush1.bf16.msra.mxu0 0
    %760 = vmatprep.subr.bf16.mxu0 0
    %761 = vmatpush1.bf16.msra.mxu0 0
    %762 = vmatprep.subr.bf16.mxu0 0
    %763 = vmatpush1.bf16.msra.mxu0 %v745
    %764 = vmatprep.subr.bf16.mxu0 0
    %765 = vmatpush1.bf16.msra.mxu0 %v744
    %766 = vmatprep.subr.bf16.mxu0 0
    %767 = vmatpush1.bf16.msra.mxu0 %v743
    %768 = vmatprep.subr.bf16.mxu0 0
    %769 = vmatpush1.bf16.msra.mxu0 %v742
    %770 = vmatprep.subr.bf16.mxu0 0
    %771 = vmatpush2.bf16.msra.mxu0 0
    %772 = vmatprep.subr.bf16.mxu0 0
    %773 = vmatpush2.bf16.msra.mxu0 0
    %774 = vmatprep.subr.bf16.mxu0 0
    %775 = vmatpush2.bf16.msra.mxu0 0
    %776 = vmatprep.subr.bf16.mxu0 0
    %777 = vmatpush2.bf16.msra.mxu0 0
    %778 = vmatprep.subr.bf16.mxu0 0
    %779 = vmatpush2.bf16.msra.mxu0 0
    %780 = vmatprep.subr.bf16.mxu0 0
    %781 = vmatpush2.bf16.msra.mxu0 0
    %782 = vmatprep.subr.bf16.mxu0 0
    %783 = vmatpush2.bf16.msra.mxu0 0
    %784 = vmatprep.subr.bf16.mxu0 0
    %785 = vmatpush2.bf16.msra.mxu0 0
    %786 = vmatprep.mubr.bf16.mxu0 0
    %787 = vmatmul.mubr.bf16.gmra.mxu0 %v752
    %v788 = vpop.f32.mrf.mxu0
    %v789 = vadd.f32 %v725, %v788
    %v790 = vpop.f32.mrf.mxu0
    %v791 = vpop.f32.mrf.mxu0
    %v792 = vpop.f32.mrf.mxu0
    %793 = vdwg.mxu0
    %v794 = vmax.f32 %v789, 0.0
    %v795 = vpack.c.bf16 %v794, %v794
    %v796 = vld [vmem:[%s4] sm:$0xf]
    %v797 = vld [vmem:[%s4 + $0x4] sm:$0xf]
    %v798 = vld [vmem:[%s4 + $0x8] sm:$0xf]
    %v799 = vld [vmem:[%s4 + $0xc] sm:$0xf]
    %v800 = vld [vmem:[%s9 + $0x3] ss:$0 sm:$0xff]
    %v805 = vunpack.c.l.b16 %v796
    %v806 = vunpack.c.l.b16 %v797
    %v807 = vunpack.c.l.b16 %v798
    %v808 = vunpack.c.l.b16 %v799
    %v809 = vpack.c.b16 %v806, %v805
    %v810 = vpack.c.b16 %v808, %v807
    %vm813 = vcmask 261120
    %v815 = vsel %vm813, %v795, 0
    %817 = vmatprep.subr.bf16.mxu0 0
    %818 = vmatpush1.bf16.msra.mxu0 0
    %819 = vmatprep.subr.bf16.mxu0 0
    %820 = vmatpush1.bf16.msra.mxu0 0
    %821 = vmatprep.subr.bf16.mxu0 0
    %822 = vmatpush1.bf16.msra.mxu0 0
    %823 = vmatprep.subr.bf16.mxu0 0
    %824 = vmatpush1.bf16.msra.mxu0 0
    %825 = vmatprep.subr.bf16.mxu0 0
    %826 = vmatpush1.bf16.msra.mxu0 0
    %827 = vmatprep.subr.bf16.mxu0 0
    %828 = vmatpush1.bf16.msra.mxu0 0
    %829 = vmatprep.subr.bf16.mxu0 0
    %830 = vmatpush1.bf16.msra.mxu0 %v810
    %831 = vmatprep.subr.bf16.mxu0 0
    %832 = vmatpush1.bf16.msra.mxu0 %v809
    %833 = vmatprep.subr.bf16.mxu0 0
    %834 = vmatpush2.bf16.msra.mxu0 0
    %835 = vmatprep.subr.bf16.mxu0 0
    %836 = vmatpush2.bf16.msra.mxu0 0
    %837 = vmatprep.subr.bf16.mxu0 0
    %838 = vmatpush2.bf16.msra.mxu0 0
    %839 = vmatprep.subr.bf16.mxu0 0
    %840 = vmatpush2.bf16.msra.mxu0 0
    %841 = vmatprep.subr.bf16.mxu0 0
    %842 = vmatpush2.bf16.msra.mxu0 0
    %843 = vmatprep.subr.bf16.mxu0 0
    %844 = vmatpush2.bf16.msra.mxu0 0
    %845 = vmatprep.subr.bf16.mxu0 0
    %846 = vmatpush2.bf16.msra.mxu0 0
    %847 = vmatprep.subr.bf16.mxu0 0
    %848 = vmatpush2.bf16.msra.mxu0 0
    %849 = vmatprep.mubr.bf16.mxu0 0
    %850 = vmatmul.mubr.bf16.gmra.mxu0 %v815
    %v851 = vpop.f32.mrf.mxu0
    %v852 = vadd.f32 %v800, %v851
    %v853 = vpop.f32.mrf.mxu0
    %v854 = vpop.f32.mrf.mxu0
    %v855 = vpop.f32.mrf.mxu0
    %856 = vdwg.mxu0
    %v857 = vpack.c.bf16 %v852, %v852
    %v858 = vld [vmem:[%s5] sm:$0xf]
    %v859 = vld [vmem:[%s5 + $0x4] sm:$0xf]
    %v860 = vld [vmem:[%s9 + $0x4] ss:$0 sm:$0xff]
    %v863 = vunpack.c.l.b16 %v858
    %v864 = vunpack.c.l.b16 %v859
    %v865 = vpack.c.b16 %v864, %v863
    %v868 = vsel %vm444, %v857, 0
    %870 = vmatprep.subr.bf16.mxu0 0
    %871 = vmatpush1.bf16.msra.mxu0 0
    %872 = vmatprep.subr.bf16.mxu0 0
    %873 = vmatpush1.bf16.msra.mxu0 0
    %874 = vmatprep.subr.bf16.mxu0 0
    %875 = vmatpush1.bf16.msra.mxu0 0
    %876 = vmatprep.subr.bf16.mxu0 0
    %877 = vmatpush1.bf16.msra.mxu0 0
    %878 = vmatprep.subr.bf16.mxu0 0
    %879 = vmatpush1.bf16.msra.mxu0 0
    %880 = vmatprep.subr.bf16.mxu0 0
    %881 = vmatpush1.bf16.msra.mxu0 0
    %882 = vmatprep.subr.bf16.mxu0 0
    %883 = vmatpush1.bf16.msra.mxu0 0
    %884 = vmatprep.subr.bf16.mxu0 0
    %885 = vmatpush1.bf16.msra.mxu0 %v865
    %886 = vmatprep.subr.bf16.mxu0 0
    %887 = vmatpush2.bf16.msra.mxu0 0
    %888 = vmatprep.subr.bf16.mxu0 0
    %889 = vmatpush2.bf16.msra.mxu0 0
    %890 = vmatprep.subr.bf16.mxu0 0
    %891 = vmatpush2.bf16.msra.mxu0 0
    %892 = vmatprep.subr.bf16.mxu0 0
    %893 = vmatpush2.bf16.msra.mxu0 0
    %894 = vmatprep.subr.bf16.mxu0 0
    %895 = vmatpush2.bf16.msra.mxu0 0
    %896 = vmatprep.subr.bf16.mxu0 0
    %897 = vmatpush2.bf16.msra.mxu0 0
    %898 = vmatprep.subr.bf16.mxu0 0
    %899 = vmatpush2.bf16.msra.mxu0 0
    %900 = vmatprep.subr.bf16.mxu0 0
    %901 = vmatpush2.bf16.msra.mxu0 0
    %902 = vmatprep.mubr.bf16.mxu0 0
    %903 = vmatmul.mubr.bf16.gmra.mxu0 %v868
    %v904 = vpop.f32.mrf.mxu0
    %v905 = vadd.f32 %v860, %v904
    %v906 = vpop.f32.mrf.mxu0
    %v907 = vpop.f32.mrf.mxu0
    %v908 = vpop.f32.mrf.mxu0
    %909 = vdwg.mxu0
    %v910 = vmax.f32 %v905, 0.0
    %v911 = vpack.c.bf16 %v910, %v910
    %v912 = vld [vmem:[%s6] sm:$0xf]
    %v913 = vld [vmem:[%s6 + $0x4] sm:$0xf]
    %v914 = vld [vmem:[%s6 + $0x8] sm:$0xf]
    %v915 = vld [vmem:[%s6 + $0xc] sm:$0xf]
    %v916 = vld [vmem:[%s9 + $0x5] ss:$0 sm:$0xff]
    %v921 = vunpack.c.l.b16 %v912
    %v922 = vunpack.c.l.b16 %v913
    %v923 = vunpack.c.l.b16 %v914
    %v924 = vunpack.c.l.b16 %v915
    %v925 = vpack.c.b16 %v922, %v921
    %v926 = vpack.c.b16 %v924, %v923
    %v930 = vsel %vm813, %v911, 0
    %932 = vmatprep.subr.bf16.mxu0 0
    %933 = vmatpush1.bf16.msra.mxu0 0
    %934 = vmatprep.subr.bf16.mxu0 0
    %935 = vmatpush1.bf16.msra.mxu0 0
    %936 = vmatprep.subr.bf16.mxu0 0
    %937 = vmatpush1.bf16.msra.mxu0 0
    %938 = vmatprep.subr.bf16.mxu0 0
    %939 = vmatpush1.bf16.msra.mxu0 0
    %940 = vmatprep.subr.bf16.mxu0 0
    %941 = vmatpush1.bf16.msra.mxu0 0
    %942 = vmatprep.subr.bf16.mxu0 0
    %943 = vmatpush1.bf16.msra.mxu0 0
    %944 = vmatprep.subr.bf16.mxu0 0
    %945 = vmatpush1.bf16.msra.mxu0 %v926
    %946 = vmatprep.subr.bf16.mxu0 0
    %947 = vmatpush1.bf16.msra.mxu0 %v925
    %948 = vmatprep.subr.bf16.mxu0 0
    %949 = vmatpush2.bf16.msra.mxu0 0
    %950 = vmatprep.subr.bf16.mxu0 0
    %951 = vmatpush2.bf16.msra.mxu0 0
    %952 = vmatprep.subr.bf16.mxu0 0
    %953 = vmatpush2.bf16.msra.mxu0 0
    %954 = vmatprep.subr.bf16.mxu0 0
    %955 = vmatpush2.bf16.msra.mxu0 0
    %956 = vmatprep.subr.bf16.mxu0 0
    %957 = vmatpush2.bf16.msra.mxu0 0
    %958 = vmatprep.subr.bf16.mxu0 0
    %959 = vmatpush2.bf16.msra.mxu0 0
    %960 = vmatprep.subr.bf16.mxu0 0
    %961 = vmatpush2.bf16.msra.mxu0 0
    %962 = vmatprep.subr.bf16.mxu0 0
    %963 = vmatpush2.bf16.msra.mxu0 0
    %964 = vmatprep.mubr.bf16.mxu0 0
    %965 = vmatmul.mubr.bf16.gmra.mxu0 %v930
    %v966 = vpop.f32.mrf.mxu0
    %v967 = vadd.f32 %v916, %v966
    %v968 = vpop.f32.mrf.mxu0
    %v969 = vpop.f32.mrf.mxu0
    %v970 = vpop.f32.mrf.mxu0
    %971 = vdwg.mxu0
    %v972 = vmax.f32 %v967, 0.0
    %v973 = vpack.c.bf16 %v972, %v972
    %v974 = vld [vmem:[%s7] sm:$0xf]
    %v975 = vld [vmem:[%s7 + $0x4] sm:$0xf]
    %v976 = vld [vmem:[%s7 + $0x8] sm:$0xf]
    %v977 = vld [vmem:[%s7 + $0xc] sm:$0xf]
    %v978 = vld [vmem:[%s7 + $0x10] sm:$0xf]
    %v979 = vld [vmem:[%s7 + $0x14] sm:$0xf]
    %v980 = vld [vmem:[%s7 + $0x18] sm:$0xf]
    %v981 = vld [vmem:[%s7 + $0x1c] sm:$0xf]
    %v982 = vld [vmem:[%s9 + $0x6] ss:$0 sm:$0xff]
    %v991 = vunpack.c.l.b16 %v974
    %v992 = vunpack.c.l.b16 %v975
    %v993 = vunpack.c.l.b16 %v976
    %v994 = vunpack.c.l.b16 %v977
    %v995 = vunpack.c.l.b16 %v978
    %v996 = vunpack.c.l.b16 %v979
    %v997 = vunpack.c.l.b16 %v980
    %v998 = vunpack.c.l.b16 %v981
    %v999 = vpack.c.b16 %v992, %v991
    %v1000 = vpack.c.b16 %v994, %v993
    %v1001 = vpack.c.b16 %v996, %v995
    %v1002 = vpack.c.b16 %v998, %v997
    %v1008 = vsel %vm750, %v973, 0
    %1010 = vmatprep.subr.bf16.mxu0 0
    %1011 = vmatpush1.bf16.msra.mxu0 0
    %1012 = vmatprep.subr.bf16.mxu0 0
    %1013 = vmatpush1.bf16.msra.mxu0 0
    %1014 = vmatprep.subr.bf16.mxu0 0
    %1015 = vmatpush1.bf16.msra.mxu0 0
    %1016 = vmatprep.subr.bf16.mxu0 0
    %1017 = vmatpush1.bf16.msra.mxu0 0
    %1018 = vmatprep.subr.bf16.mxu0 0
    %1019 = vmatpush1.bf16.msra.mxu0 %v1002
    %1020 = vmatprep.subr.bf16.mxu0 0
    %1021 = vmatpush1.bf16.msra.mxu0 %v1001
    %1022 = vmatprep.subr.bf16.mxu0 0
    %1023 = vmatpush1.bf16.msra.mxu0 %v1000
    %1024 = vmatprep.subr.bf16.mxu0 0
    %1025 = vmatpush1.bf16.msra.mxu0 %v999
    %1026 = vmatprep.subr.bf16.mxu0 0
    %1027 = vmatpush2.bf16.msra.mxu0 0
    %1028 = vmatprep.subr.bf16.mxu0 0
    %1029 = vmatpush2.bf16.msra.mxu0 0
    %1030 = vmatprep.subr.bf16.mxu0 0
    %1031 = vmatpush2.bf16.msra.mxu0 0
    %1032 = vmatprep.subr.bf16.mxu0 0
    %1033 = vmatpush2.bf16.msra.mxu0 0
    %1034 = vmatprep.subr.bf16.mxu0 0
    %1035 = vmatpush2.bf16.msra.mxu0 0
    %1036 = vmatprep.subr.bf16.mxu0 0
    %1037 = vmatpush2.bf16.msra.mxu0 0
    %1038 = vmatprep.subr.bf16.mxu0 0
    %1039 = vmatpush2.bf16.msra.mxu0 0
    %1040 = vmatprep.subr.bf16.mxu0 0
    %1041 = vmatpush2.bf16.msra.mxu0 0
    %1042 = vmatprep.mubr.bf16.mxu0 0
    %1043 = vmatmul.mubr.bf16.gmra.mxu0 %v1008
    %v1044 = vpop.f32.mrf.mxu0
    %v1045 = vadd.f32 %v982, %v1044
    %v1046 = vpop.f32.mrf.mxu0
    %v1047 = vpop.f32.mrf.mxu0
    %v1048 = vpop.f32.mrf.mxu0
    %1049 = vdwg.mxu0
    %v1050 = vmax.f32 %v1045, 0.0
    %v1051 = vpack.c.bf16 %v1050, %v1050
    %v1052 = vld [vmem:[%s8] sm:$0xff]
    %v1053 = vld [vmem:[%s8 + $0x8] sm:$0xff]
    %v1054 = vld [vmem:[%s8 + $0x10] sm:$0xff]
    %v1055 = vld [vmem:[%s8 + $0x18] sm:$0xf]
    %v1056 = vld [vmem:[%s8 + $0x1c] sm:$0xff]
    %v1057 = vld [vmem:[%s8 + $0x24] sm:$0xff]
    %v1058 = vld [vmem:[%s8 + $0x2c] sm:$0xff]
    %v1059 = vld [vmem:[%s8 + $0x34] sm:$0xf]
    %v1060 = vld [vmem:[%s8 + $0x38] sm:$0xff]
    %v1061 = vld [vmem:[%s8 + $0x40] sm:$0xff]
    %v1062 = vld [vmem:[%s8 + $0x48] sm:$0xff]
    %v1063 = vld [vmem:[%s8 + $0x50] sm:$0xf]
    %v1064 = vld [vmem:[%s8 + $0x54] sm:$0xff]
    %v1065 = vld [vmem:[%s8 + $0x5c] sm:$0xff]
    %v1066 = vld [vmem:[%s8 + $0x64] sm:$0xff]
    %v1067 = vld [vmem:[%s8 + $0x6c] sm:$0xf]
    %v1068 = vld [vmem:[%s8 + $0x70] sm:$0xff]
    %v1069 = vld [vmem:[%s8 + $0x78] sm:$0xff]
    %v1070 = vld [vmem:[%s8 + $0x80] sm:$0xff]
    %v1071 = vld [vmem:[%s8 + $0x88] sm:$0xf]
    %v1072 = vld [vmem:[%s8 + $0x8c] sm:$0xff]
    %v1073 = vld [vmem:[%s8 + $0x94] sm:$0xff]
    %v1074 = vld [vmem:[%s8 + $0x9c] sm:$0xff]
    %v1075 = vld [vmem:[%s8 + $0xa4] sm:$0xf]
    %v1076 = vld [vmem:[%s8 + $0xa8] sm:$0xff]
    %v1077 = vld [vmem:[%s8 + $0xb0] sm:$0xff]
    %v1078 = vld [vmem:[%s8 + $0xb8] sm:$0xff]
    %v1079 = vld [vmem:[%s8 + $0xc0] sm:$0xf]
    %v1080 = vld [vmem:[%s8 + $0xc4] sm:$0xff]
    %v1081 = vld [vmem:[%s8 + $0xcc] sm:$0xff]
    %v1082 = vld [vmem:[%s8 + $0xd4] sm:$0xff]
    %v1083 = vld [vmem:[%s8 + $0xdc] sm:$0xf]
    %v1084 = vld [vmem:[%s8 + $0xe0] sm:$0xff]
    %v1085 = vld [vmem:[%s8 + $0xe8] sm:$0xff]
    %v1086 = vld [vmem:[%s8 + $0xf0] sm:$0xff]
    %v1087 = vld [vmem:[%s8 + $0xf8] sm:$0xf]
    %v1088 = vld [vmem:[%s8 + $0xfc] sm:$0xff]
    %v1089 = vld [vmem:[%s8 + $0x104] sm:$0xff]
    %v1090 = vld [vmem:[%s8 + $0x10c] sm:$0xff]
    %v1091 = vld [vmem:[%s8 + $0x114] sm:$0xf]
    %v1092 = vld [vmem:[%s8 + $0x118] sm:$0xff]
    %v1093 = vld [vmem:[%s8 + $0x120] sm:$0xff]
    %v1094 = vld [vmem:[%s8 + $0x128] sm:$0xff]
    %v1095 = vld [vmem:[%s8 + $0x130] sm:$0xf]
    %v1096 = vld [vmem:[%s8 + $0x134] sm:$0xff]
    %v1097 = vld [vmem:[%s8 + $0x13c] sm:$0xff]
    %v1098 = vld [vmem:[%s8 + $0x144] sm:$0xff]
    %v1099 = vld [vmem:[%s8 + $0x14c] sm:$0xf]
    %v1100 = vld [vmem:[%s8 + $0x150] sm:$0xff]
    %v1101 = vld [vmem:[%s8 + $0x158] sm:$0xff]
    %v1102 = vld [vmem:[%s8 + $0x160] sm:$0xff]
    %v1103 = vld [vmem:[%s8 + $0x168] sm:$0xf]
    %v1104 = vld [vmem:[%s8 + $0x16c] sm:$0xff]
    %v1105 = vld [vmem:[%s8 + $0x174] sm:$0xff]
    %v1106 = vld [vmem:[%s8 + $0x17c] sm:$0xff]
    %v1107 = vld [vmem:[%s8 + $0x184] sm:$0xf]
    %v1108 = vld [vmem:[%s8 + $0x188] sm:$0xff]
    %v1109 = vld [vmem:[%s8 + $0x190] sm:$0xff]
    %v1110 = vld [vmem:[%s8 + $0x198] sm:$0xff]
    %v1111 = vld [vmem:[%s8 + $0x1a0] sm:$0xf]
    %v1112 = vld [vmem:[%s8 + $0x1a4] sm:$0xff]
    %v1113 = vld [vmem:[%s8 + $0x1ac] sm:$0xff]
    %v1114 = vld [vmem:[%s8 + $0x1b4] sm:$0xff]
    %v1115 = vld [vmem:[%s8 + $0x1bc] sm:$0xf]
    %s1116 = scalar_lea.vmem %s9, 7
    %v1117 = vld [vmem:[%s1116] ss:$8 sm:$0xf]
    %v1118 = vld [vmem:[%s1116] ss:$8 sm:$0x70]
    %v1119 = vor.u32 %v1117, %v1118
    %v1121 = vlaneseq
    %v1122 = vshrl.u32 %v1121, 7
    %v1123 = vsub.s32 0, %v1122
    %v1124 = vrot.slane %v1119, %v1123
    %v1125 = vlaneseq
    %v1126 = vshrl.u32 %v1125, 7
    %v1127 = vsub.s32 1, %v1126
    %v1128 = vrot.slane %v1119, %v1127
    %v1129 = vlaneseq
    %v1130 = vshrl.u32 %v1129, 7
    %v1131 = vsub.s32 2, %v1130
    %v1132 = vrot.slane %v1119, %v1131
    %v1133 = vlaneseq
    %v1134 = vshrl.u32 %v1133, 7
    %v1135 = vsub.s32 3, %v1134
    %v1136 = vrot.slane %v1119, %v1135
    %v1137 = vlaneseq
    %v1138 = vshrl.u32 %v1137, 7
    %v1139 = vsub.s32 4, %v1138
    %v1140 = vrot.slane %v1119, %v1139
    %v1141 = vlaneseq
    %v1142 = vshrl.u32 %v1141, 7
    %v1143 = vsub.s32 5, %v1142
    %v1144 = vrot.slane %v1119, %v1143
    %v1145 = vlaneseq
    %v1146 = vshrl.u32 %v1145, 7
    %v1147 = vsub.s32 6, %v1146
    %v1148 = vrot.slane %v1119, %v1147
    %v1220 = vunpack.c.l.b16 %v1052
    %v1221 = vunpack.c.h.b16 %v1052
    %v1222 = vunpack.c.l.b16 %v1053
    %v1223 = vunpack.c.h.b16 %v1053
    %v1224 = vunpack.c.l.b16 %v1054
    %v1225 = vunpack.c.h.b16 %v1054
    %v1226 = vunpack.c.l.b16 %v1055
    %v1227 = vunpack.c.l.b16 %v1056
    %v1228 = vunpack.c.h.b16 %v1056
    %v1229 = vunpack.c.l.b16 %v1057
    %v1230 = vunpack.c.h.b16 %v1057
    %v1231 = vunpack.c.l.b16 %v1058
    %v1232 = vunpack.c.h.b16 %v1058
    %v1233 = vunpack.c.l.b16 %v1059
    %v1234 = vunpack.c.l.b16 %v1060
    %v1235 = vunpack.c.h.b16 %v1060
    %v1236 = vunpack.c.l.b16 %v1061
    %v1237 = vunpack.c.h.b16 %v1061
    %v1238 = vunpack.c.l.b16 %v1062
    %v1239 = vunpack.c.h.b16 %v1062
    %v1240 = vunpack.c.l.b16 %v1063
    %v1241 = vunpack.c.l.b16 %v1064
    %v1242 = vunpack.c.h.b16 %v1064
    %v1243 = vunpack.c.l.b16 %v1065
    %v1244 = vunpack.c.h.b16 %v1065
    %v1245 = vunpack.c.l.b16 %v1066
    %v1246 = vunpack.c.h.b16 %v1066
    %v1247 = vunpack.c.l.b16 %v1067
    %v1248 = vunpack.c.l.b16 %v1068
    %v1249 = vunpack.c.h.b16 %v1068
    %v1250 = vunpack.c.l.b16 %v1069
    %v1251 = vunpack.c.h.b16 %v1069
    %v1252 = vunpack.c.l.b16 %v1070
    %v1253 = vunpack.c.h.b16 %v1070
    %v1254 = vunpack.c.l.b16 %v1071
    %v1255 = vunpack.c.l.b16 %v1072
    %v1256 = vunpack.c.h.b16 %v1072
    %v1257 = vunpack.c.l.b16 %v1073
    %v1258 = vunpack.c.h.b16 %v1073
    %v1259 = vunpack.c.l.b16 %v1074
    %v1260 = vunpack.c.h.b16 %v1074
    %v1261 = vunpack.c.l.b16 %v1075
    %v1262 = vunpack.c.l.b16 %v1076
    %v1263 = vunpack.c.h.b16 %v1076
    %v1264 = vunpack.c.l.b16 %v1077
    %v1265 = vunpack.c.h.b16 %v1077
    %v1266 = vunpack.c.l.b16 %v1078
    %v1267 = vunpack.c.h.b16 %v1078
    %v1268 = vunpack.c.l.b16 %v1079
    %v1269 = vunpack.c.l.b16 %v1080
    %v1270 = vunpack.c.h.b16 %v1080
    %v1271 = vunpack.c.l.b16 %v1081
    %v1272 = vunpack.c.h.b16 %v1081
    %v1273 = vunpack.c.l.b16 %v1082
    %v1274 = vunpack.c.h.b16 %v1082
    %v1275 = vunpack.c.l.b16 %v1083
    %v1276 = vunpack.c.l.b16 %v1084
    %v1277 = vunpack.c.h.b16 %v1084
    %v1278 = vunpack.c.l.b16 %v1085
    %v1279 = vunpack.c.h.b16 %v1085
    %v1280 = vunpack.c.l.b16 %v1086
    %v1281 = vunpack.c.h.b16 %v1086
    %v1282 = vunpack.c.l.b16 %v1087
    %v1283 = vunpack.c.l.b16 %v1088
    %v1284 = vunpack.c.h.b16 %v1088
    %v1285 = vunpack.c.l.b16 %v1089
    %v1286 = vunpack.c.h.b16 %v1089
    %v1287 = vunpack.c.l.b16 %v1090
    %v1288 = vunpack.c.h.b16 %v1090
    %v1289 = vunpack.c.l.b16 %v1091
    %v1290 = vunpack.c.l.b16 %v1092
    %v1291 = vunpack.c.h.b16 %v1092
    %v1292 = vunpack.c.l.b16 %v1093
    %v1293 = vunpack.c.h.b16 %v1093
    %v1294 = vunpack.c.l.b16 %v1094
    %v1295 = vunpack.c.h.b16 %v1094
    %v1296 = vunpack.c.l.b16 %v1095
    %v1297 = vunpack.c.l.b16 %v1096
    %v1298 = vunpack.c.h.b16 %v1096
    %v1299 = vunpack.c.l.b16 %v1097
    %v1300 = vunpack.c.h.b16 %v1097
    %v1301 = vunpack.c.l.b16 %v1098
    %v1302 = vunpack.c.h.b16 %v1098
    %v1303 = vunpack.c.l.b16 %v1099
    %v1304 = vunpack.c.l.b16 %v1100
    %v1305 = vunpack.c.h.b16 %v1100
    %v1306 = vunpack.c.l.b16 %v1101
    %v1307 = vunpack.c.h.b16 %v1101
    %v1308 = vunpack.c.l.b16 %v1102
    %v1309 = vunpack.c.h.b16 %v1102
    %v1310 = vunpack.c.l.b16 %v1103
    %v1311 = vunpack.c.l.b16 %v1104
    %v1312 = vunpack.c.h.b16 %v1104
    %v1313 = vunpack.c.l.b16 %v1105
    %v1314 = vunpack.c.h.b16 %v1105
    %v1315 = vunpack.c.l.b16 %v1106
    %v1316 = vunpack.c.h.b16 %v1106
    %v1317 = vunpack.c.l.b16 %v1107
    %v1318 = vunpack.c.l.b16 %v1108
    %v1319 = vunpack.c.h.b16 %v1108
    %v1320 = vunpack.c.l.b16 %v1109
    %v1321 = vunpack.c.h.b16 %v1109
    %v1322 = vunpack.c.l.b16 %v1110
    %v1323 = vunpack.c.h.b16 %v1110
    %v1324 = vunpack.c.l.b16 %v1111
    %v1325 = vunpack.c.l.b16 %v1112
    %v1326 = vunpack.c.h.b16 %v1112
    %v1327 = vunpack.c.l.b16 %v1113
    %v1328 = vunpack.c.h.b16 %v1113
    %v1329 = vunpack.c.l.b16 %v1114
    %v1330 = vunpack.c.h.b16 %v1114
    %v1331 = vunpack.c.l.b16 %v1115
    %v1332 = vpack.c.b16 %v1227, %v1220
    %v1333 = vpack.c.b16 %v1228, %v1221
    %v1334 = vpack.c.b16 %v1229, %v1222
    %v1335 = vpack.c.b16 %v1230, %v1223
    %v1336 = vpack.c.b16 %v1231, %v1224
    %v1337 = vpack.c.b16 %v1232, %v1225
    %v1338 = vpack.c.b16 %v1233, %v1226
    %v1339 = vpack.c.b16 %v1241, %v1234
    %v1340 = vpack.c.b16 %v1242, %v1235
    %v1341 = vpack.c.b16 %v1243, %v1236
    %v1342 = vpack.c.b16 %v1244, %v1237
    %v1343 = vpack.c.b16 %v1245, %v1238
    %v1344 = vpack.c.b16 %v1246, %v1239
    %v1345 = vpack.c.b16 %v1247, %v1240
    %v1346 = vpack.c.b16 %v1255, %v1248
    %v1347 = vpack.c.b16 %v1256, %v1249
    %v1348 = vpack.c.b16 %v1257, %v1250
    %v1349 = vpack.c.b16 %v1258, %v1251
    %v1350 = vpack.c.b16 %v1259, %v1252
    %v1351 = vpack.c.b16 %v1260, %v1253
    %v1352 = vpack.c.b16 %v1261, %v1254
    %v1353 = vpack.c.b16 %v1269, %v1262
    %v1354 = vpack.c.b16 %v1270, %v1263
    %v1355 = vpack.c.b16 %v1271, %v1264
    %v1356 = vpack.c.b16 %v1272, %v1265
    %v1357 = vpack.c.b16 %v1273, %v1266
    %v1358 = vpack.c.b16 %v1274, %v1267
    %v1359 = vpack.c.b16 %v1275, %v1268
    %v1360 = vpack.c.b16 %v1283, %v1276
    %v1361 = vpack.c.b16 %v1284, %v1277
    %v1362 = vpack.c.b16 %v1285, %v1278
    %v1363 = vpack.c.b16 %v1286, %v1279
    %v1364 = vpack.c.b16 %v1287, %v1280
    %v1365 = vpack.c.b16 %v1288, %v1281
    %v1366 = vpack.c.b16 %v1289, %v1282
    %v1367 = vpack.c.b16 %v1297, %v1290
    %v1368 = vpack.c.b16 %v1298, %v1291
    %v1369 = vpack.c.b16 %v1299, %v1292
    %v1370 = vpack.c.b16 %v1300, %v1293
    %v1371 = vpack.c.b16 %v1301, %v1294
    %v1372 = vpack.c.b16 %v1302, %v1295
    %v1373 = vpack.c.b16 %v1303, %v1296
    %v1374 = vpack.c.b16 %v1311, %v1304
    %v1375 = vpack.c.b16 %v1312, %v1305
    %v1376 = vpack.c.b16 %v1313, %v1306
    %v1377 = vpack.c.b16 %v1314, %v1307
    %v1378 = vpack.c.b16 %v1315, %v1308
    %v1379 = vpack.c.b16 %v1316, %v1309
    %v1380 = vpack.c.b16 %v1317, %v1310
    %v1381 = vpack.c.b16 %v1325, %v1318
    %v1382 = vpack.c.b16 %v1326, %v1319
    %v1383 = vpack.c.b16 %v1327, %v1320
    %v1384 = vpack.c.b16 %v1328, %v1321
    %v1385 = vpack.c.b16 %v1329, %v1322
    %v1386 = vpack.c.b16 %v1330, %v1323
    %v1387 = vpack.c.b16 %v1331, %v1324
    %1444 = vmatprep.subr.bf16.mxu0 %v1382
    %1445 = vmatpush1.bf16.msra.mxu0 %v1381
    %1446 = vmatprep.subr.bf16.mxu0 %v1375
    %1447 = vmatpush1.bf16.msra.mxu0 %v1374
    %1448 = vmatprep.subr.bf16.mxu0 %v1368
    %1449 = vmatpush1.bf16.msra.mxu0 %v1367
    %1450 = vmatprep.subr.bf16.mxu0 %v1361
    %1451 = vmatpush1.bf16.msra.mxu0 %v1360
    %1452 = vmatprep.subr.bf16.mxu0 %v1354
    %1453 = vmatpush1.bf16.msra.mxu0 %v1353
    %1454 = vmatprep.subr.bf16.mxu0 %v1347
    %1455 = vmatpush1.bf16.msra.mxu0 %v1346
    %1456 = vmatprep.subr.bf16.mxu0 %v1340
    %1457 = vmatpush1.bf16.msra.mxu0 %v1339
    %1458 = vmatprep.subr.bf16.mxu0 %v1333
    %1459 = vmatpush1.bf16.msra.mxu0 %v1332
    %1460 = vmatprep.subr.bf16.mxu0 0
    %1461 = vmatpush2.bf16.msra.mxu0 0
    %1462 = vmatprep.subr.bf16.mxu0 0
    %1463 = vmatpush2.bf16.msra.mxu0 0
    %1464 = vmatprep.subr.bf16.mxu0 0
    %1465 = vmatpush2.bf16.msra.mxu0 0
    %1466 = vmatprep.subr.bf16.mxu0 0
    %1467 = vmatpush2.bf16.msra.mxu0 0
    %1468 = vmatprep.subr.bf16.mxu0 0
    %1469 = vmatpush2.bf16.msra.mxu0 0
    %1470 = vmatprep.subr.bf16.mxu0 0
    %1471 = vmatpush2.bf16.msra.mxu0 0
    %1472 = vmatprep.subr.bf16.mxu0 0
    %1473 = vmatpush2.bf16.msra.mxu0 0
    %1474 = vmatprep.subr.bf16.mxu0 0
    %1475 = vmatpush2.bf16.msra.mxu0 0
    %1476 = vmatprep.mubr.bf16.mxu0 0
    %1477 = vmatmul.mubr.bf16.gmra.mxu0 %v1051
    %v1478 = vpop.f32.mrf.mxu0
    %v1479 = vadd.f32 %v1124, %v1478
    %v1480 = vpop.f32.mrf.mxu0
    %v1481 = vadd.f32 %v1128, %v1480
    %v1482 = vpop.f32.mrf.mxu0
    %v1483 = vpop.f32.mrf.mxu0
    %1484 = vdwg.mxu0
    %1485 = vmatprep.subr.bf16.mxu0 %v1384
    %1486 = vmatpush1.bf16.msra.mxu0 %v1383
    %1487 = vmatprep.subr.bf16.mxu0 %v1377
    %1488 = vmatpush1.bf16.msra.mxu0 %v1376
    %1489 = vmatprep.subr.bf16.mxu0 %v1370
    %1490 = vmatpush1.bf16.msra.mxu0 %v1369
    %1491 = vmatprep.subr.bf16.mxu0 %v1363
    %1492 = vmatpush1.bf16.msra.mxu0 %v1362
    %1493 = vmatprep.subr.bf16.mxu0 %v1356
    %1494 = vmatpush1.bf16.msra.mxu0 %v1355
    %1495 = vmatprep.subr.bf16.mxu0 %v1349
    %1496 = vmatpush1.bf16.msra.mxu0 %v1348
    %1497 = vmatprep.subr.bf16.mxu0 %v1342
    %1498 = vmatpush1.bf16.msra.mxu0 %v1341
    %1499 = vmatprep.subr.bf16.mxu0 %v1335
    %1500 = vmatpush1.bf16.msra.mxu0 %v1334
    %1501 = vmatprep.subr.bf16.mxu0 0
    %1502 = vmatpush2.bf16.msra.mxu0 0
    %1503 = vmatprep.subr.bf16.mxu0 0
    %1504 = vmatpush2.bf16.msra.mxu0 0
    %1505 = vmatprep.subr.bf16.mxu0 0
    %1506 = vmatpush2.bf16.msra.mxu0 0
    %1507 = vmatprep.subr.bf16.mxu0 0
    %1508 = vmatpush2.bf16.msra.mxu0 0
    %1509 = vmatprep.subr.bf16.mxu0 0
    %1510 = vmatpush2.bf16.msra.mxu0 0
    %1511 = vmatprep.subr.bf16.mxu0 0
    %1512 = vmatpush2.bf16.msra.mxu0 0
    %1513 = vmatprep.subr.bf16.mxu0 0
    %1514 = vmatpush2.bf16.msra.mxu0 0
    %1515 = vmatprep.subr.bf16.mxu0 0
    %1516 = vmatpush2.bf16.msra.mxu0 0
    %1517 = vmatprep.mubr.bf16.mxu0 0
    %1518 = vmatmul.mubr.bf16.gmra.mxu0 %v1051
    %v1519 = vpop.f32.mrf.mxu0
    %v1520 = vadd.f32 %v1132, %v1519
    %v1521 = vpop.f32.mrf.mxu0
    %v1522 = vadd.f32 %v1136, %v1521
    %v1523 = vpop.f32.mrf.mxu0
    %v1524 = vpop.f32.mrf.mxu0
    %1525 = vdwg.mxu0
    %1526 = vmatprep.subr.bf16.mxu0 %v1386
    %1527 = vmatpush1.bf16.msra.mxu0 %v1385
    %1528 = vmatprep.subr.bf16.mxu0 %v1379
    %1529 = vmatpush1.bf16.msra.mxu0 %v1378
    %1530 = vmatprep.subr.bf16.mxu0 %v1372
    %1531 = vmatpush1.bf16.msra.mxu0 %v1371
    %1532 = vmatprep.subr.bf16.mxu0 %v1365
    %1533 = vmatpush1.bf16.msra.mxu0 %v1364
    %1534 = vmatprep.subr.bf16.mxu0 %v1358
    %1535 = vmatpush1.bf16.msra.mxu0 %v1357
    %1536 = vmatprep.subr.bf16.mxu0 %v1351
    %1537 = vmatpush1.bf16.msra.mxu0 %v1350
    %1538 = vmatprep.subr.bf16.mxu0 %v1344
    %1539 = vmatpush1.bf16.msra.mxu0 %v1343
    %1540 = vmatprep.subr.bf16.mxu0 %v1337
    %1541 = vmatpush1.bf16.msra.mxu0 %v1336
    %1542 = vmatprep.subr.bf16.mxu0 0
    %1543 = vmatpush2.bf16.msra.mxu0 0
    %1544 = vmatprep.subr.bf16.mxu0 0
    %1545 = vmatpush2.bf16.msra.mxu0 0
    %1546 = vmatprep.subr.bf16.mxu0 0
    %1547 = vmatpush2.bf16.msra.mxu0 0
    %1548 = vmatprep.subr.bf16.mxu0 0
    %1549 = vmatpush2.bf16.msra.mxu0 0
    %1550 = vmatprep.subr.bf16.mxu0 0
    %1551 = vmatpush2.bf16.msra.mxu0 0
    %1552 = vmatprep.subr.bf16.mxu0 0
    %1553 = vmatpush2.bf16.msra.mxu0 0
    %1554 = vmatprep.subr.bf16.mxu0 0
    %1555 = vmatpush2.bf16.msra.mxu0 0
    %1556 = vmatprep.subr.bf16.mxu0 0
    %1557 = vmatpush2.bf16.msra.mxu0 0
    %1558 = vmatprep.mubr.bf16.mxu0 0
    %1559 = vmatmul.mubr.bf16.gmra.mxu0 %v1051
    %v1560 = vpop.f32.mrf.mxu0
    %v1561 = vadd.f32 %v1140, %v1560
    %v1562 = vpop.f32.mrf.mxu0
    %v1563 = vadd.f32 %v1144, %v1562
    %v1564 = vpop.f32.mrf.mxu0
    %v1565 = vpop.f32.mrf.mxu0
    %1566 = vdwg.mxu0
    %1567 = vmatprep.subr.bf16.mxu0 0
    %1568 = vmatpush1.bf16.msra.mxu0 %v1387
    %1569 = vmatprep.subr.bf16.mxu0 0
    %1570 = vmatpush1.bf16.msra.mxu0 %v1380
    %1571 = vmatprep.subr.bf16.mxu0 0
    %1572 = vmatpush1.bf16.msra.mxu0 %v1373
    %1573 = vmatprep.subr.bf16.mxu0 0
    %1574 = vmatpush1.bf16.msra.mxu0 %v1366
    %1575 = vmatprep.subr.bf16.mxu0 0
    %1576 = vmatpush1.bf16.msra.mxu0 %v1359
    %1577 = vmatprep.subr.bf16.mxu0 0
    %1578 = vmatpush1.bf16.msra.mxu0 %v1352
    %1579 = vmatprep.subr.bf16.mxu0 0
    %1580 = vmatpush1.bf16.msra.mxu0 %v1345
    %1581 = vmatprep.subr.bf16.mxu0 0
    %1582 = vmatpush1.bf16.msra.mxu0 %v1338
    %1583 = vmatprep.subr.bf16.mxu0 0
    %1584 = vmatpush2.bf16.msra.mxu0 0
    %1585 = vmatprep.subr.bf16.mxu0 0
    %1586 = vmatpush2.bf16.msra.mxu0 0
    %1587 = vmatprep.subr.bf16.mxu0 0
    %1588 = vmatpush2.bf16.msra.mxu0 0
    %1589 = vmatprep.subr.bf16.mxu0 0
    %1590 = vmatpush2.bf16.msra.mxu0 0
    %1591 = vmatprep.subr.bf16.mxu0 0
    %1592 = vmatpush2.bf16.msra.mxu0 0
    %1593 = vmatprep.subr.bf16.mxu0 0
    %1594 = vmatpush2.bf16.msra.mxu0 0
    %1595 = vmatprep.subr.bf16.mxu0 0
    %1596 = vmatpush2.bf16.msra.mxu0 0
    %1597 = vmatprep.subr.bf16.mxu0 0
    %1598 = vmatpush2.bf16.msra.mxu0 0
    %1599 = vmatprep.mubr.bf16.mxu0 0
    %1600 = vmatmul.mubr.bf16.gmra.mxu0 %v1051
    %v1601 = vpop.f32.mrf.mxu0
    %v1602 = vadd.f32 %v1148, %v1601
    %v1603 = vpop.f32.mrf.mxu0
    %v1604 = vpop.f32.mrf.mxu0
    %v1605 = vpop.f32.mrf.mxu0
    %1606 = vdwg.mxu0
    %v1607 = vsub.f32 0.0, %v1479
    %v1608 = vsub.f32 0.0, %v1481
    %v1609 = vsub.f32 0.0, %v1520
    %v1610 = vsub.f32 0.0, %v1522
    %v1611 = vsub.f32 0.0, %v1561
    %v1612 = vsub.f32 0.0, %v1563
    %v1613 = vsub.f32 0.0, %v1602
    %v1614 = vmul.f32 %v1607, 1.442695
    %v1615 = vpow.pop %v1614
    %v1616 = vmul.f32 %v1608, 1.442695
    %v1617 = vpow.pop %v1616
    %v1618 = vmul.f32 %v1609, 1.442695
    %v1619 = vpow.pop %v1618
    %v1620 = vmul.f32 %v1610, 1.442695
    %v1621 = vpow.pop %v1620
    %v1622 = vmul.f32 %v1611, 1.442695
    %v1623 = vpow.pop %v1622
    %v1624 = vmul.f32 %v1612, 1.442695
    %v1625 = vpow.pop %v1624
    %v1626 = vmul.f32 %v1613, 1.442695
    %v1627 = vpow.pop %v1626
    %v1628 = vadd.f32 %v1615, 1.0
    %v1629 = vadd.f32 %v1617, 1.0
    %v1630 = vadd.f32 %v1619, 1.0
    %v1631 = vadd.f32 %v1621, 1.0
    %v1632 = vadd.f32 %v1623, 1.0
    %v1633 = vadd.f32 %v1625, 1.0
    %v1634 = vadd.f32 %v1627, 1.0
    %v1635 = vrcp.pop %v1628
    %v1636 = vrcp.pop %v1629
    %v1637 = vrcp.pop %v1630
    %v1638 = vrcp.pop %v1631
    %v1639 = vrcp.pop %v1632
    %v1640 = vrcp.pop %v1633
    %v1641 = vrcp.pop %v1634
    %1642 = vst [vmem:[#allocation2] sm:$0xff] %v1635
    %1643 = vst [vmem:[#allocation2 + $0x8] sm:$0xff] %v1636
    %1644 = vst [vmem:[#allocation2 + $0x10] sm:$0xff] %v1637
    %1645 = vst [vmem:[#allocation2 + $0x18] sm:$0xff] %v1638
    %1646 = vst [vmem:[#allocation2 + $0x20] sm:$0xff] %v1639
    %1647 = vst [vmem:[#allocation2 + $0x28] sm:$0xff] %v1640
    %1648 = vst.msk [vmem:[#allocation2 + $0x30] sm:$0xff] %vm444, %v1641
    // Predicated region
    $region42: #{tpu_custom_call.1} parent=1 // pred_check
      _
    $region43: #{tpu_custom_call.1} parent=1 // pred_check_branch
      %1650 = sbr.rel (0) target = $region45
    $region44: #{tpu_custom_call.1} parent=1 // pred_region
      %s1652 = ssub.s32 896, 896
      %1653 = vsyncadd [#allocation3], %s1652
      %s1655 = sshll.u32 [#allocation2], 4
      %s1656 = int_to_ptr.vmem [resolvable:$true] %s1655
      %1658 = dma.vmem_to_hbm [thread:$0]  %s1656, 896, %s10, [#allocation3]
    $region45: #{tpu_custom_call.1} parent=1 // pred_fallthru
      _
    // Predicated region
    $region46: #{tpu_custom_call.1} parent=1 // pred_check
      _
    $region47: #{tpu_custom_call.1} parent=1 // pred_check_branch
      %1660 = sbr.rel (0) target = $region49
    $region48: #{tpu_custom_call.1} parent=1 // pred_region
      %1661 = dma.done [#allocation3], 896
    $region49: #{tpu_custom_call.1} parent=1 // pred_fallthru
      _
    %1662 = vsyncpa [#allocation3], 1

</llo_original>
